<compile_context>
chip_gen: v7x
topology: tpu7x:2x2x1
jax: 0.10.0
libtpu: 0.0.40
codegen_flags: <defaults>
</compile_context>

<pallas_src>
from functools import partial

import jax
import jax.numpy as jnp
from jax import lax
from jax.experimental import pallas as pl
from jax.experimental.pallas import tpu as pltpu


def _convnext_kernel(x_hbm, dww_ref, dwb_ref, w1_ref, b1_ref, w2_ref, b2_ref,
                     o_ref, xw_ref, copy_sem,
                     *, kernel_size: int, dilation: int, pad: int,
                     t_tile: int, window: int, eps: float,
                     apply_residual: bool):
    n = pl.program_id(0)
    t = pl.program_id(1)
    nt = pl.num_programs(1)
    slot = t & 1

    # ---- double-buffered halo-window DMA (prefetch next tile) ----
    def start_window_copy(tile_idx, slot_idx):
        start = pl.multiple_of(tile_idx * t_tile, 8)
        pltpu.make_async_copy(
            x_hbm.at[n, pl.ds(start, window), :],
            xw_ref.at[slot_idx],
            copy_sem.at[slot_idx],
        ).start()

    @pl.when(t == 0)
    def _():                       # prime the current slot on this row's first tile
        start_window_copy(t, slot)

    @pl.when(t + 1 < nt)
    def _():                       # prefetch the next tile into the other slot
        start_window_copy(t + 1, 1 - slot)

    # wait on the slot we are about to consume (sizes/sem drive the wait)
    pltpu.make_async_copy(
        x_hbm.at[n, pl.ds(0, window), :], xw_ref.at[slot], copy_sem.at[slot]
    ).wait()

    xw = xw_ref.at[slot]           # (window, C) ref view — slice per tap, no full load

    # ---- depthwise Conv1d (groups=C), cross-correlation like PyTorch ----
    # output row i (tile-local) uses window rows [i + k*dilation], k=0..K-1.
    acc = xw[0:t_tile, :] * dww_ref[0:1, :]            # first tap writes acc
    for k in range(1, kernel_size):                    # unrolled, static slices
        off = k * dilation
        acc = acc + xw[off:off + t_tile, :] * dww_ref[k:k + 1, :]
    y = acc + dwb_ref[...]                             # (t_tile, C) f32

    # residual rows = window rows [pad, pad + t_tile)
    x_res = xw[pad:pad + t_tile, :]

    # ---- LayerNorm over channels (two-pass; affine folded into w1/b1) ----
    c_inv = 1.0 / y.shape[-1]
    mean = jnp.sum(y, axis=-1, keepdims=True) * c_inv
    d = y - mean
    var = jnp.sum(d * d, axis=-1, keepdims=True) * c_inv
    yn = d * lax.rsqrt(var + eps)

    # ---- pwconv1 (Linear C -> H) on bf16 MXU, tanh-GELU in bf16 (EUP) ----
    h = jnp.dot(yn.astype(jnp.bfloat16), w1_ref[...],
                preferred_element_type=jnp.float32) + b1_ref[...]
    # TODO(synk): PyTorch nn.GELU() default is exact erf; tanh approx used for
    # speed (error is negligible after the gamma=1e-6 layer scale).
    h = jax.nn.gelu(h.astype(jnp.bfloat16), approximate=True)

    # ---- pwconv2 (Linear H -> C) on bf16 MXU; gamma folded into w2/b2 ----
    z = jnp.dot(h, w2_ref[...], preferred_element_type=jnp.float32) + b2_ref[...]

    # drop_path with drop_prob=0.0 (or eval mode) is the identity.
    out = x_res + z if apply_residual else z
    o_ref[0] = out.astype(o_ref.dtype)


def _round_up(x, m):
    return (x + m - 1) // m * m


def convnext_block(x_nct, params, *, kernel_size=7, dilation=1, eps=1e-6,
                   t_tile=512, apply_residual=True):
    """x_nct: (N, C, T) float32, PyTorch Conv1d layout.  Returns (N, C, T)."""
    pad = int(dilation * (kernel_size - 1) / 2)

    # Channels-last for the kernel.  (Hoist these transposes + the halo pad to
    # model entry/exit when stacking many blocks.)
    x = jnp.transpose(x_nct, (0, 2, 1))                # (N, T, C)
    N, T, C = x.shape
    H = params["w1"].shape[1]
    K = params["dw_w"].shape[0]

    # ---- time tiling (sweep 512-1024 on v5e/v6e, 256-512 on v7x) ----
    T_TILE = min(_round_up(T, 8), _round_up(t_tile, 8))
    nt = pl.cdiv(T, T_TILE)
    T_pad = nt * T_TILE
    window = T_TILE + 2 * pad                          # halo'd rows per tile

    # Halo + tail padding so every manual window DMA has a static, in-bounds
    # size (this pad fuses with the transpose above; for long-T production,
    # keep the model NTC and mask the halo in-kernel instead).
    x_hbm = jnp.pad(x, ((0, 0), (pad, pad + (T_pad - T)), (0, 0)))

    # ---- fold LayerNorm affine and layer-scale gamma into the linears,
    #      and pre-cast the matmul weights to bf16 (MXU-native) ----
    ln_w, ln_b = params["ln_w"][0], params["ln_b"][0]
    gamma = params["gamma"][0]
    w1f = (params["w1"] * ln_w[:, None]).astype(jnp.bfloat16)      # (C, H)
    b1f = (params["b1"][0] + ln_b @ params["w1"])[None, :]         # (1, H) f32
    w2f = (params["w2"] * gamma[None, :]).astype(jnp.bfloat16)     # (H, C)
    b2f = (params["b2"][0] * gamma)[None, :]                       # (1, C) f32

    # ---- VMEM budget: size it to what we actually use (+ headroom) ----
    weight_bytes = (K * C + C) * 4 + (C * H + H * C) * 2 + (H + C) * 4
    vmem_est = (2 * weight_bytes            # auto double-buffered weight inputs
                + 2 * window * C * 4        # halo-window double buffer
                + 2 * T_TILE * C * 4        # double-buffered output tile
                + 4 * T_TILE * H * 4        # (T_TILE, H) intermediates headroom
                + (4 << 20))                # Mosaic internal scratch headroom
    vmem_limit = int(max(16 << 20, min(vmem_est, 64 << 20)))

    # TODO(synk): at production widths (C>=512) mark w1f/w2f specs with
    # pipeline_mode=pl.Buffered(1) (or DMA them once into scratch) to avoid
    # duplicating grid-invariant weight buffers on v7x's 64 MiB VMEM.
    full = lambda shape: pl.BlockSpec(shape, lambda n, t: (0, 0))

    out = pl.pallas_call(
        partial(_convnext_kernel, kernel_size=K, dilation=dilation, pad=pad,
                t_tile=T_TILE, window=window, eps=eps,
                apply_residual=apply_residual),
        out_shape=jax.ShapeDtypeStruct((N, T, C), x.dtype),
        grid=(N, nt),
        in_specs=[
            pl.BlockSpec(memory_space=pl.ANY),        # padded x: manual halo DMA
            full((K, C)),                             # depthwise weight (K, C)
            full((1, C)),                             # depthwise bias
            full((C, H)),                             # pwconv1 weight (bf16, LN folded)
            full((1, H)),                             # pwconv1 bias   (LN folded)
            full((H, C)),                             # pwconv2 weight (bf16, gamma folded)
            full((1, C)),                             # pwconv2 bias   (gamma folded)
        ],
        out_specs=pl.BlockSpec((1, T_TILE, C), lambda n, t: (n, t, 0)),
        scratch_shapes=[
            pltpu.VMEM((2, window, C), jnp.float32),  # double-buffered halo window
            pltpu.SemaphoreType.DMA((2,)),
        ],
        compiler_params=pltpu.CompilerParams(
            # batch axis shards across TensorCores; time axis is the sequential
            # carry for the window prefetch.
            dimension_semantics=("parallel", "arbitrary"),
            vmem_limit_bytes=vmem_limit,
        ),
    )(x_hbm, params["dw_w"], params["dw_b"], w1f, b1f, w2f, b2f)

    return jnp.transpose(out, (0, 2, 1))              # back to (N, C, T)


def convnext_block_reference(x_nct, params, *, kernel_size=7, dilation=1, eps=1e-6):
    """Pure-JAX fp32 reference mirroring the PyTorch forward, for validation."""
    pad = int(dilation * (kernel_size - 1) / 2)
    x = jnp.transpose(x_nct, (0, 2, 1))               # (N, T, C)
    N, T, C = x.shape
    xp = jnp.pad(x, ((0, 0), (pad, pad), (0, 0)))
    y = jnp.zeros((N, T, C), jnp.float32)
    for k in range(kernel_size):
        off = k * dilation
        y = y + xp[:, off:off + T, :] * params["dw_w"][k][None, None, :]
    y = y + params["dw_b"][0][None, None, :]
    u = jnp.mean(y, axis=-1, keepdims=True)
    d = y - u
    var = jnp.mean(d * d, axis=-1, keepdims=True)
    yn = d * jax.lax.rsqrt(var + eps) * params["ln_w"][0] + params["ln_b"][0]
    h = yn @ params["w1"] + params["b1"][0]
    h = 0.5 * h * (1.0 + jax.lax.erf(h / jnp.sqrt(2.0)))
    z = h @ params["w2"] + params["b2"][0]
    z = z * params["gamma"][0]
    out = x + z
    return jnp.transpose(out, (0, 2, 1))


def make_params(key, dim, hidden, kernel_size, layer_scale_init_value=1e-6):
    """Deterministic synthetic parameters (shapes match the nn.Module's __init__)."""
    ks = jax.random.split(key, 6)
    # Conv1d(dim, dim, K, groups=dim): weight (dim, 1, K) -> stored as (K, dim)
    dw_w = 0.1 * jax.random.normal(ks[0], (dim, 1, kernel_size), jnp.float32)
    dw_b = 0.1 * jax.random.normal(ks[1], (dim,), jnp.float32)
    # Linear(dim, hidden): weight (hidden, dim) -> stored transposed (dim, hidden)
    w1 = (1.0 / jnp.sqrt(dim)) * jax.random.normal(ks[2], (hidden, dim), jnp.float32)
    b1 = 0.1 * jax.random.normal(ks[3], (hidden,), jnp.float32)
    w2 = (1.0 / jnp.sqrt(hidden)) * jax.random.normal(ks[4], (dim, hidden), jnp.float32)
    b2 = 0.1 * jax.random.normal(ks[5], (dim,), jnp.float32)
    return {
        "dw_w": jnp.transpose(dw_w[:, 0, :], (1, 0)),          # (K, dim)
        "dw_b": dw_b[None, :],                                  # (1, dim)
        "ln_w": jnp.ones((1, dim), jnp.float32),                # LayerNorm init
        "ln_b": jnp.zeros((1, dim), jnp.float32),
        "w1": jnp.transpose(w1, (1, 0)),                        # (dim, hidden)
        "b1": b1[None, :],                                      # (1, hidden)
        "w2": jnp.transpose(w2, (1, 0)),                        # (hidden, dim)
        "b2": b2[None, :],                                      # (1, dim)
        "gamma": layer_scale_init_value * jnp.ones((1, dim), jnp.float32),
    }


if __name__ == "__main__":
    # TODO(synk): DropPath's stochastic-depth training branch (drop_prob>0,
    # training=True) is not implemented; it is the identity here (eval mode).
    N, DIM, T = 2, 128, 80
    MLP_RATIO, K, DIL = 4.0, 7, 1
    HIDDEN = int(MLP_RATIO * DIM)

    key = jax.random.PRNGKey(0)
    kx, kp = jax.random.split(key)
    x = jax.random.normal(kx, (N, DIM, T), jnp.float32)         # PyTorch (N, C, T)
    params = make_params(kp, DIM, HIDDEN, K)

    ref = convnext_block_reference(x, params, kernel_size=K, dilation=DIL)

    # multi-tile path (exercises halo DMA double-buffering + masked last tile)
    out_tiled = convnext_block(x, params, kernel_size=K, dilation=DIL, t_tile=32)
    out_tiled = jax.block_until_ready(out_tiled)
    assert out_tiled.shape == x.shape and out_tiled.dtype == x.dtype
    assert jnp.allclose(out_tiled, ref, atol=1e-3, rtol=1e-3), "tiled mismatch"

    # single-tile path (default tile covers the whole sequence here)
    out_full = convnext_block(x, params, kernel_size=K, dilation=DIL)
    out_full = jax.block_until_ready(out_full)
    assert out_full.shape == x.shape and out_full.dtype == x.dtype
    assert jnp.allclose(out_full, ref, atol=1e-3, rtol=1e-3), "full mismatch"

    print("KERNEL_OK")
</pallas_src>

<mosaic_0001>
module attributes {stable_mosaic.version = 11 : i64} {
  func.func @_convnext_kernel(%arg0: i32, %arg1: i32, %arg2: memref<2x102x128xf32, #tpu.memory_space<any>>, %arg3: memref<7x128xf32, #tpu.memory_space<vmem>>, %arg4: memref<1x128xf32, #tpu.memory_space<vmem>>, %arg5: memref<128x512xbf16, #tpu.memory_space<vmem>>, %arg6: memref<1x512xf32, #tpu.memory_space<vmem>>, %arg7: memref<512x128xbf16, #tpu.memory_space<vmem>>, %arg8: memref<1x128xf32, #tpu.memory_space<vmem>>, %arg9: memref<1x32x128xf32, #tpu.memory_space<vmem>>, %arg10: memref<2x38x128xf32, #tpu.memory_space<vmem>>, %arg11: memref<2x!tpu.dma_semaphore, #tpu.memory_space<semaphore_mem>>) attributes {dimension_semantics = [#tpu.dimension_semantics<parallel>, #tpu.dimension_semantics<arbitrary>], iteration_bounds = array<i64: 2, 3>, scalar_prefetch = 0 : i64, scratch_operands = 2 : i64, tpu.core_type = #tpu.core_type<tc>, window_params = [{}, {pipeline_mode = #tpu.pipeline_mode<synchronous>, transform_indices = @transform_1, window_bounds = array<i64: 7, 128>}, {pipeline_mode = #tpu.pipeline_mode<synchronous>, transform_indices = @transform_2, window_bounds = array<i64: 1, 128>}, {pipeline_mode = #tpu.pipeline_mode<synchronous>, transform_indices = @transform_3, window_bounds = array<i64: 128, 512>}, {pipeline_mode = #tpu.pipeline_mode<synchronous>, transform_indices = @transform_4, window_bounds = array<i64: 1, 512>}, {pipeline_mode = #tpu.pipeline_mode<synchronous>, transform_indices = @transform_5, window_bounds = array<i64: 512, 128>}, {pipeline_mode = #tpu.pipeline_mode<synchronous>, transform_indices = @transform_6, window_bounds = array<i64: 1, 128>}, {transform_indices = @transform_7, window_bounds = array<i64: 1, 32, 128>}]} {
    %c1_i32 = arith.constant 1 : i32
    %0 = arith.andi %arg1, %c1_i32 : i32
    %c0_i32 = arith.constant 0 : i32
    %1 = arith.cmpi eq, %arg1, %c0_i32 : i32
    %2 = arith.extui %1 : i1 to i32
    %c0_i32_0 = arith.constant 0 : i32
    %3 = arith.cmpi ne, %2, %c0_i32_0 : i32
    scf.if %3 {
      %c32_i32 = arith.constant 32 : i32
      %113 = arith.muli %arg1, %c32_i32 : i32
      %114 = tpu.assume_multiple %113, 8 : i32
      %c0_i32_69 = arith.constant 0 : i32
      %115 = tpu.memref_slice %arg2[%arg0, %114, %c0_i32_69] : memref<2x102x128xf32, #tpu.memory_space<any>> -> memref<1x38x128xf32, #tpu.memory_space<any>>
      %116 = tpu.memref_squeeze %115 : memref<1x38x128xf32, #tpu.memory_space<any>> -> memref<38x128xf32, #tpu.memory_space<any>>
      %c0_i32_70 = arith.constant 0 : i32
      %c0_i32_71 = arith.constant 0 : i32
      %117 = tpu.memref_slice %arg10[%0, %c0_i32_70, %c0_i32_71] : memref<2x38x128xf32, #tpu.memory_space<vmem>> -> memref<1x38x128xf32, #tpu.memory_space<vmem>>
      %118 = tpu.memref_squeeze %117 : memref<1x38x128xf32, #tpu.memory_space<vmem>> -> memref<38x128xf32, #tpu.memory_space<vmem>>
      %119 = tpu.memref_slice %arg11[%0] : memref<2x!tpu.dma_semaphore, #tpu.memory_space<semaphore_mem>> -> memref<1x!tpu.dma_semaphore, #tpu.memory_space<semaphore_mem>>
      %120 = tpu.memref_squeeze %119 : memref<1x!tpu.dma_semaphore, #tpu.memory_space<semaphore_mem>> -> memref<!tpu.dma_semaphore, #tpu.memory_space<semaphore_mem>>
      tpu.enqueue_dma source(%116 : memref<38x128xf32, #tpu.memory_space<any>>) target(%118 : memref<38x128xf32, #tpu.memory_space<vmem>>) target_semaphore(%120 : memref<!tpu.dma_semaphore, #tpu.memory_space<semaphore_mem>>)
    } else {
    }
    %c1_i32_1 = arith.constant 1 : i32
    %4 = arith.addi %arg1, %c1_i32_1 : i32
    %c3_i32 = arith.constant 3 : i32
    %5 = arith.cmpi slt, %4, %c3_i32 : i32
    %6 = arith.extui %5 : i1 to i32
    %c0_i32_2 = arith.constant 0 : i32
    %7 = arith.cmpi ne, %6, %c0_i32_2 : i32
    scf.if %7 {
      %c1_i32_69 = arith.constant 1 : i32
      %113 = arith.addi %arg1, %c1_i32_69 : i32
      %c1_i32_70 = arith.constant 1 : i32
      %114 = arith.subi %c1_i32_70, %0 : i32
      %c32_i32 = arith.constant 32 : i32
      %115 = arith.muli %113, %c32_i32 : i32
      %116 = tpu.assume_multiple %115, 8 : i32
      %c0_i32_71 = arith.constant 0 : i32
      %117 = tpu.memref_slice %arg2[%arg0, %116, %c0_i32_71] : memref<2x102x128xf32, #tpu.memory_space<any>> -> memref<1x38x128xf32, #tpu.memory_space<any>>
      %118 = tpu.memref_squeeze %117 : memref<1x38x128xf32, #tpu.memory_space<any>> -> memref<38x128xf32, #tpu.memory_space<any>>
      %c0_i32_72 = arith.constant 0 : i32
      %c0_i32_73 = arith.constant 0 : i32
      %119 = tpu.memref_slice %arg10[%114, %c0_i32_72, %c0_i32_73] : memref<2x38x128xf32, #tpu.memory_space<vmem>> -> memref<1x38x128xf32, #tpu.memory_space<vmem>>
      %120 = tpu.memref_squeeze %119 : memref<1x38x128xf32, #tpu.memory_space<vmem>> -> memref<38x128xf32, #tpu.memory_space<vmem>>
      %121 = tpu.memref_slice %arg11[%114] : memref<2x!tpu.dma_semaphore, #tpu.memory_space<semaphore_mem>> -> memref<1x!tpu.dma_semaphore, #tpu.memory_space<semaphore_mem>>
      %122 = tpu.memref_squeeze %121 : memref<1x!tpu.dma_semaphore, #tpu.memory_space<semaphore_mem>> -> memref<!tpu.dma_semaphore, #tpu.memory_space<semaphore_mem>>
      tpu.enqueue_dma source(%118 : memref<38x128xf32, #tpu.memory_space<any>>) target(%120 : memref<38x128xf32, #tpu.memory_space<vmem>>) target_semaphore(%122 : memref<!tpu.dma_semaphore, #tpu.memory_space<semaphore_mem>>)
    } else {
    }
    %c0_i32_3 = arith.constant 0 : i32
    %c0_i32_4 = arith.constant 0 : i32
    %8 = tpu.memref_slice %arg2[%arg0, %c0_i32_3, %c0_i32_4] : memref<2x102x128xf32, #tpu.memory_space<any>> -> memref<1x38x128xf32, #tpu.memory_space<any>>
    %9 = tpu.memref_squeeze %8 : memref<1x38x128xf32, #tpu.memory_space<any>> -> memref<38x128xf32, #tpu.memory_space<any>>
    %c0_i32_5 = arith.constant 0 : i32
    %c0_i32_6 = arith.constant 0 : i32
    %10 = tpu.memref_slice %arg10[%0, %c0_i32_5, %c0_i32_6] : memref<2x38x128xf32, #tpu.memory_space<vmem>> -> memref<1x38x128xf32, #tpu.memory_space<vmem>>
    %11 = tpu.memref_squeeze %10 : memref<1x38x128xf32, #tpu.memory_space<vmem>> -> memref<38x128xf32, #tpu.memory_space<vmem>>
    %12 = tpu.memref_slice %arg11[%0] : memref<2x!tpu.dma_semaphore, #tpu.memory_space<semaphore_mem>> -> memref<1x!tpu.dma_semaphore, #tpu.memory_space<semaphore_mem>>
    %13 = tpu.memref_squeeze %12 : memref<1x!tpu.dma_semaphore, #tpu.memory_space<semaphore_mem>> -> memref<!tpu.dma_semaphore, #tpu.memory_space<semaphore_mem>>
    tpu.wait_dma2 semaphore(%13 : memref<!tpu.dma_semaphore, #tpu.memory_space<semaphore_mem>>) src(%9 : memref<38x128xf32, #tpu.memory_space<any>>) dst(%11 : memref<38x128xf32, #tpu.memory_space<vmem>>)
    %c0_i32_7 = arith.constant 0 : i32
    %c0_i32_8 = arith.constant 0 : i32
    %14 = tpu.memref_slice %arg10[%0, %c0_i32_7, %c0_i32_8] : memref<2x38x128xf32, #tpu.memory_space<vmem>> -> memref<1x38x128xf32, #tpu.memory_space<vmem>>
    %15 = tpu.memref_squeeze %14 : memref<1x38x128xf32, #tpu.memory_space<vmem>> -> memref<38x128xf32, #tpu.memory_space<vmem>>
    %c0 = arith.constant 0 : index
    %c0_9 = arith.constant 0 : index
    %16 = vector.load %15[%c0, %c0_9] : memref<38x128xf32, #tpu.memory_space<vmem>>, vector<32x128xf32>
    %c0_10 = arith.constant 0 : index
    %c0_11 = arith.constant 0 : index
    %17 = vector.load %arg3[%c0_10, %c0_11] : memref<7x128xf32, #tpu.memory_space<vmem>>, vector<1x128xf32>
    %18 = vector.broadcast %17 : vector<1x128xf32> to vector<32x128xf32>
    %19 = arith.mulf %16, %18 : vector<32x128xf32>
    %c0_i32_12 = arith.constant 0 : i32
    %c0_i32_13 = arith.constant 0 : i32
    %20 = tpu.memref_slice %arg10[%0, %c0_i32_12, %c0_i32_13] : memref<2x38x128xf32, #tpu.memory_space<vmem>> -> memref<1x38x128xf32, #tpu.memory_space<vmem>>
    %21 = tpu.memref_squeeze %20 : memref<1x38x128xf32, #tpu.memory_space<vmem>> -> memref<38x128xf32, #tpu.memory_space<vmem>>
    %c1 = arith.constant 1 : index
    %c0_14 = arith.constant 0 : index
    %22 = vector.load %21[%c1, %c0_14] : memref<38x128xf32, #tpu.memory_space<vmem>>, vector<32x128xf32>
    %c1_15 = arith.constant 1 : index
    %c0_16 = arith.constant 0 : index
    %23 = vector.load %arg3[%c1_15, %c0_16] : memref<7x128xf32, #tpu.memory_space<vmem>>, vector<1x128xf32>
    %24 = vector.broadcast %23 : vector<1x128xf32> to vector<32x128xf32>
    %25 = arith.mulf %22, %24 : vector<32x128xf32>
    %26 = arith.addf %19, %25 : vector<32x128xf32>
    %c0_i32_17 = arith.constant 0 : i32
    %c0_i32_18 = arith.constant 0 : i32
    %27 = tpu.memref_slice %arg10[%0, %c0_i32_17, %c0_i32_18] : memref<2x38x128xf32, #tpu.memory_space<vmem>> -> memref<1x38x128xf32, #tpu.memory_space<vmem>>
    %28 = tpu.memref_squeeze %27 : memref<1x38x128xf32, #tpu.memory_space<vmem>> -> memref<38x128xf32, #tpu.memory_space<vmem>>
    %c2 = arith.constant 2 : index
    %c0_19 = arith.constant 0 : index
    %29 = vector.load %28[%c2, %c0_19] : memref<38x128xf32, #tpu.memory_space<vmem>>, vector<32x128xf32>
    %c2_20 = arith.constant 2 : index
    %c0_21 = arith.constant 0 : index
    %30 = vector.load %arg3[%c2_20, %c0_21] : memref<7x128xf32, #tpu.memory_space<vmem>>, vector<1x128xf32>
    %31 = vector.broadcast %30 : vector<1x128xf32> to vector<32x128xf32>
    %32 = arith.mulf %29, %31 : vector<32x128xf32>
    %33 = arith.addf %26, %32 : vector<32x128xf32>
    %c0_i32_22 = arith.constant 0 : i32
    %c0_i32_23 = arith.constant 0 : i32
    %34 = tpu.memref_slice %arg10[%0, %c0_i32_22, %c0_i32_23] : memref<2x38x128xf32, #tpu.memory_space<vmem>> -> memref<1x38x128xf32, #tpu.memory_space<vmem>>
    %35 = tpu.memref_squeeze %34 : memref<1x38x128xf32, #tpu.memory_space<vmem>> -> memref<38x128xf32, #tpu.memory_space<vmem>>
    %c3 = arith.constant 3 : index
    %c0_24 = arith.constant 0 : index
    %36 = vector.load %35[%c3, %c0_24] : memref<38x128xf32, #tpu.memory_space<vmem>>, vector<32x128xf32>
    %c3_25 = arith.constant 3 : index
    %c0_26 = arith.constant 0 : index
    %37 = vector.load %arg3[%c3_25, %c0_26] : memref<7x128xf32, #tpu.memory_space<vmem>>, vector<1x128xf32>
    %38 = vector.broadcast %37 : vector<1x128xf32> to vector<32x128xf32>
    %39 = arith.mulf %36, %38 : vector<32x128xf32>
    %40 = arith.addf %33, %39 : vector<32x128xf32>
    %c0_i32_27 = arith.constant 0 : i32
    %c0_i32_28 = arith.constant 0 : i32
    %41 = tpu.memref_slice %arg10[%0, %c0_i32_27, %c0_i32_28] : memref<2x38x128xf32, #tpu.memory_space<vmem>> -> memref<1x38x128xf32, #tpu.memory_space<vmem>>
    %42 = tpu.memref_squeeze %41 : memref<1x38x128xf32, #tpu.memory_space<vmem>> -> memref<38x128xf32, #tpu.memory_space<vmem>>
    %c4 = arith.constant 4 : index
    %c0_29 = arith.constant 0 : index
    %43 = vector.load %42[%c4, %c0_29] : memref<38x128xf32, #tpu.memory_space<vmem>>, vector<32x128xf32>
    %c4_30 = arith.constant 4 : index
    %c0_31 = arith.constant 0 : index
    %44 = vector.load %arg3[%c4_30, %c0_31] : memref<7x128xf32, #tpu.memory_space<vmem>>, vector<1x128xf32>
    %45 = vector.broadcast %44 : vector<1x128xf32> to vector<32x128xf32>
    %46 = arith.mulf %43, %45 : vector<32x128xf32>
    %47 = arith.addf %40, %46 : vector<32x128xf32>
    %c0_i32_32 = arith.constant 0 : i32
    %c0_i32_33 = arith.constant 0 : i32
    %48 = tpu.memref_slice %arg10[%0, %c0_i32_32, %c0_i32_33] : memref<2x38x128xf32, #tpu.memory_space<vmem>> -> memref<1x38x128xf32, #tpu.memory_space<vmem>>
    %49 = tpu.memref_squeeze %48 : memref<1x38x128xf32, #tpu.memory_space<vmem>> -> memref<38x128xf32, #tpu.memory_space<vmem>>
    %c5 = arith.constant 5 : index
    %c0_34 = arith.constant 0 : index
    %50 = vector.load %49[%c5, %c0_34] : memref<38x128xf32, #tpu.memory_space<vmem>>, vector<32x128xf32>
    %c5_35 = arith.constant 5 : index
    %c0_36 = arith.constant 0 : index
    %51 = vector.load %arg3[%c5_35, %c0_36] : memref<7x128xf32, #tpu.memory_space<vmem>>, vector<1x128xf32>
    %52 = vector.broadcast %51 : vector<1x128xf32> to vector<32x128xf32>
    %53 = arith.mulf %50, %52 : vector<32x128xf32>
    %54 = arith.addf %47, %53 : vector<32x128xf32>
    %c0_i32_37 = arith.constant 0 : i32
    %c0_i32_38 = arith.constant 0 : i32
    %55 = tpu.memref_slice %arg10[%0, %c0_i32_37, %c0_i32_38] : memref<2x38x128xf32, #tpu.memory_space<vmem>> -> memref<1x38x128xf32, #tpu.memory_space<vmem>>
    %56 = tpu.memref_squeeze %55 : memref<1x38x128xf32, #tpu.memory_space<vmem>> -> memref<38x128xf32, #tpu.memory_space<vmem>>
    %c6 = arith.constant 6 : index
    %c0_39 = arith.constant 0 : index
    %57 = vector.load %56[%c6, %c0_39] : memref<38x128xf32, #tpu.memory_space<vmem>>, vector<32x128xf32>
    %c6_40 = arith.constant 6 : index
    %c0_41 = arith.constant 0 : index
    %58 = vector.load %arg3[%c6_40, %c0_41] : memref<7x128xf32, #tpu.memory_space<vmem>>, vector<1x128xf32>
    %59 = vector.broadcast %58 : vector<1x128xf32> to vector<32x128xf32>
    %60 = arith.mulf %57, %59 : vector<32x128xf32>
    %61 = arith.addf %54, %60 : vector<32x128xf32>
    %c0_42 = arith.constant 0 : index
    %c0_43 = arith.constant 0 : index
    %62 = vector.load %arg4[%c0_42, %c0_43] : memref<1x128xf32, #tpu.memory_space<vmem>>, vector<1x128xf32>
    %63 = vector.broadcast %62 : vector<1x128xf32> to vector<32x128xf32>
    %64 = arith.addf %61, %63 : vector<32x128xf32>
    %c0_i32_44 = arith.constant 0 : i32
    %c0_i32_45 = arith.constant 0 : i32
    %65 = tpu.memref_slice %arg10[%0, %c0_i32_44, %c0_i32_45] : memref<2x38x128xf32, #tpu.memory_space<vmem>> -> memref<1x38x128xf32, #tpu.memory_space<vmem>>
    %66 = tpu.memref_squeeze %65 : memref<1x38x128xf32, #tpu.memory_space<vmem>> -> memref<38x128xf32, #tpu.memory_space<vmem>>
    %c3_46 = arith.constant 3 : index
    %c0_47 = arith.constant 0 : index
    %67 = vector.load %66[%c3_46, %c0_47] : memref<38x128xf32, #tpu.memory_space<vmem>>, vector<32x128xf32>
    %cst = arith.constant dense<0.000000e+00> : vector<32xf32>
    %68 = vector.multi_reduction <add>, %64, %cst [1] : vector<32x128xf32> to vector<32xf32>
    %69 = vector.shape_cast %68 : vector<32xf32> to vector<32x1xf32>
    %cst_48 = arith.constant 7.812500e-03 : f32
    %70 = vector.broadcast %cst_48 : f32 to vector<32x1xf32>
    %71 = arith.mulf %69, %70 : vector<32x1xf32>
    %72 = vector.broadcast %71 : vector<32x1xf32> to vector<32x128xf32>
    %73 = arith.subf %64, %72 : vector<32x128xf32>
    %74 = arith.mulf %73, %73 : vector<32x128xf32>
    %cst_49 = arith.constant dense<0.000000e+00> : vector<32xf32>
    %75 = vector.multi_reduction <add>, %74, %cst_49 [1] : vector<32x128xf32> to vector<32xf32>
    %76 = vector.shape_cast %75 : vector<32xf32> to vector<32x1xf32>
    %cst_50 = arith.constant 7.812500e-03 : f32
    %77 = vector.broadcast %cst_50 : f32 to vector<32x1xf32>
    %78 = arith.mulf %76, %77 : vector<32x1xf32>
    %cst_51 = arith.constant 9.99999997E-7 : f32
    %79 = vector.broadcast %cst_51 : f32 to vector<32x1xf32>
    %80 = arith.addf %78, %79 : vector<32x1xf32>
    %81 = math.rsqrt %80 : vector<32x1xf32>
    %82 = vector.broadcast %81 : vector<32x1xf32> to vector<32x128xf32>
    %83 = arith.mulf %73, %82 : vector<32x128xf32>
    %84 = arith.truncf %83 : vector<32x128xf32> to vector<32x128xbf16>
    %c0_52 = arith.constant 0 : index
    %c0_53 = arith.constant 0 : index
    %85 = vector.load %arg5[%c0_52, %c0_53] : memref<128x512xbf16, #tpu.memory_space<vmem>>, vector<128x512xbf16>
    %cst_54 = arith.constant dense<0.000000e+00> : vector<32x512xf32>
    %86 = tpu.matmul %84, %85, %cst_54 {dimension_numbers = #tpu.dot_dimension_numbers<[1], [0], [0], [1], [0, 0, 1, 1], [], []>} : vector<32x128xbf16>, vector<128x512xbf16>, vector<32x512xf32> -> vector<32x512xf32>
    %c0_55 = arith.constant 0 : index
    %c0_56 = arith.constant 0 : index
    %87 = vector.load %arg6[%c0_55, %c0_56] : memref<1x512xf32, #tpu.memory_space<vmem>>, vector<1x512xf32>
    %88 = vector.broadcast %87 : vector<1x512xf32> to vector<32x512xf32>
    %89 = arith.addf %86, %88 : vector<32x512xf32>
    %90 = arith.truncf %89 : vector<32x512xf32> to vector<32x512xbf16>
    %91 = arith.mulf %90, %90 : vector<32x512xbf16>
    %92 = arith.mulf %90, %91 : vector<32x512xbf16>
    %cst_57 = arith.constant 4.467770e-02 : bf16
    %93 = vector.broadcast %cst_57 : bf16 to vector<32x512xbf16>
    %94 = arith.mulf %93, %92 : vector<32x512xbf16>
    %95 = arith.addf %90, %94 : vector<32x512xbf16>
    %cst_58 = arith.constant 7.968750e-01 : bf16
    %96 = vector.broadcast %cst_58 : bf16 to vector<32x512xbf16>
    %97 = arith.mulf %96, %95 : vector<32x512xbf16>
    %98 = math.tanh %97 : vector<32x512xbf16>
    %cst_59 = arith.constant 1.000000e+00 : bf16
    %99 = vector.broadcast %cst_59 : bf16 to vector<32x512xbf16>
    %100 = arith.addf %99, %98 : vector<32x512xbf16>
    %cst_60 = arith.constant 5.000000e-01 : bf16
    %101 = vector.broadcast %cst_60 : bf16 to vector<32x512xbf16>
    %102 = arith.mulf %101, %100 : vector<32x512xbf16>
    %103 = arith.mulf %90, %102 : vector<32x512xbf16>
    %c0_61 = arith.constant 0 : index
    %c0_62 = arith.constant 0 : index
    %104 = vector.load %arg7[%c0_61, %c0_62] : memref<512x128xbf16, #tpu.memory_space<vmem>>, vector<512x128xbf16>
    %cst_63 = arith.constant dense<0.000000e+00> : vector<32x128xf32>
    %105 = tpu.matmul %103, %104, %cst_63 {dimension_numbers = #tpu.dot_dimension_numbers<[1], [0], [0], [1], [0, 0, 1, 1], [], []>} : vector<32x512xbf16>, vector<512x128xbf16>, vector<32x128xf32> -> vector<32x128xf32>
    %c0_64 = arith.constant 0 : index
    %c0_65 = arith.constant 0 : index
    %106 = vector.load %arg8[%c0_64, %c0_65] : memref<1x128xf32, #tpu.memory_space<vmem>>, vector<1x128xf32>
    %107 = vector.broadcast %106 : vector<1x128xf32> to vector<32x128xf32>
    %108 = arith.addf %105, %107 : vector<32x128xf32>
    %109 = arith.addf %67, %108 : vector<32x128xf32>
    %c0_66 = arith.constant 0 : index
    %c0_67 = arith.constant 0 : index
    %c0_68 = arith.constant 0 : index
    %110 = vector.load %arg9[%c0_66, %c0_67, %c0_68] : memref<1x32x128xf32, #tpu.memory_space<vmem>>, vector<1x32x128xf32>
    %111 = vector.shape_cast %110 : vector<1x32x128xf32> to vector<32x128xf32>
    %112 = vector.shape_cast %109 : vector<32x128xf32> to vector<1x32x128xf32>
    tpu.vector_store %arg9[%c0_66, %c0_67, %c0_68], %112 {strides = array<i32>} : memref<1x32x128xf32, #tpu.memory_space<vmem>>, vector<1x32x128xf32>,
    return
  }
  func.func @transform_1(%arg0: i32, %arg1: i32) -> (i32, i32) {
    %c0_i32 = arith.constant 0 : i32
    %c0_i32_0 = arith.constant 0 : i32
    %c0_i32_1 = arith.constant 0 : i32
    return %c0_i32, %c0_i32_0 : i32, i32
  }
  func.func @transform_2(%arg0: i32, %arg1: i32) -> (i32, i32) {
    %c0_i32 = arith.constant 0 : i32
    %c0_i32_0 = arith.constant 0 : i32
    %c0_i32_1 = arith.constant 0 : i32
    return %c0_i32, %c0_i32_0 : i32, i32
  }
  func.func @transform_3(%arg0: i32, %arg1: i32) -> (i32, i32) {
    %c0_i32 = arith.constant 0 : i32
    %c0_i32_0 = arith.constant 0 : i32
    %c0_i32_1 = arith.constant 0 : i32
    return %c0_i32, %c0_i32_0 : i32, i32
  }
  func.func @transform_4(%arg0: i32, %arg1: i32) -> (i32, i32) {
    %c0_i32 = arith.constant 0 : i32
    %c0_i32_0 = arith.constant 0 : i32
    %c0_i32_1 = arith.constant 0 : i32
    return %c0_i32, %c0_i32_0 : i32, i32
  }
  func.func @transform_5(%arg0: i32, %arg1: i32) -> (i32, i32) {
    %c0_i32 = arith.constant 0 : i32
    %c0_i32_0 = arith.constant 0 : i32
    %c0_i32_1 = arith.constant 0 : i32
    return %c0_i32, %c0_i32_0 : i32, i32
  }
  func.func @transform_6(%arg0: i32, %arg1: i32) -> (i32, i32) {
    %c0_i32 = arith.constant 0 : i32
    %c0_i32_0 = arith.constant 0 : i32
    %c0_i32_1 = arith.constant 0 : i32
    return %c0_i32, %c0_i32_0 : i32, i32
  }
  func.func @transform_7(%arg0: i32, %arg1: i32) -> (i32, i32, i32) {
    %c0_i32 = arith.constant 0 : i32
    %c0_i32_0 = arith.constant 0 : i32
    return %arg0, %arg1, %c0_i32 : i32, i32, i32
  }
}

</mosaic_0001>

<llo_original>
// kernel: tpu_custom_call.1
$region0: #{tpu_custom_call.1}
  #allocation0 [shape = 'u32[]', space=smem, size = 0x4, offset = 0x4, fixed_abs, tag = 'smem constant byte address 0x4 - core index']
  #allocation1 [shape = 'u32[144,128]{1,0:T(1,128)}', space=vmem, size = 0x12000, scoped, tag = 'internal scratch']
  #allocation2 [shape = 'f32[2,38,128]{2,1,0:T(8,128)}', space=vmem, size = 0xa000, scoped, tag = 'scratch operand']
  #allocation3 [shape = 's32[2]{0}', space=sflag, size = 0x8, scoped, tag = 'scratch operand']
  #allocation8 [shape = 's32[]', space=sflag, size = 0x4, offset = 0, fixed_abs, tag = 'sflag constant byte address 0x0 - dummy sync flag']
  #allocation9 [shape = 's32[]', space=sflag, size = 0x4, offset = 0, fixed_abs, tag = 'sflag constant byte address 0x0 - dummy sync flag']
  %s0 = inlined_call_operand.vmem [shape: f32[2,102,128], index: 0, kind: input, shape index: {}]
  %s1 = inlined_call_operand.vmem [shape: f32[7,128], index: 1, kind: input, shape index: {}]
  %s2 = inlined_call_operand.vmem [shape: f32[1,128], index: 2, kind: input, shape index: {}]
  %s3 = inlined_call_operand.vmem [shape: bf16[128,512], index: 3, kind: input, shape index: {}]
  %s4 = inlined_call_operand.vmem [shape: f32[1,512], index: 4, kind: input, shape index: {}]
  %s5 = inlined_call_operand.hbm [shape: bf16[512,128], index: 5, kind: input, shape index: {}]
  %s6 = inlined_call_operand.vmem [shape: f32[1,128], index: 6, kind: input, shape index: {}]
  %s7 = inlined_call_operand.hbm [shape: f32[2,80,128], index: 7, kind: output, shape index: {}]
  %s8 = sld [smem:[#allocation0]]
  $region143: #{tpu_custom_call.1} parent=0
    _
  %s10 = ssub.s32 1, %s8
  %s11 = scalar_select 0, %s10, %s8
  $region1: #{tpu_custom_call.1} parent=0
    #allocation4 [shape = 'u8[131072]{0}', space=vmem, size = 0x20000, scoped, tag = 'input window, operand 5, single buffered']
    #allocation5 [shape = 's32[2]{0}', space=sflag, size = 0x8, scoped, tag = 'scoped memory for tpu_custom_call.1']
    #allocation6 [shape = 's32[2]{0}', space=sflag, size = 0x8, scoped, tag = 'scoped memory for tpu_custom_call.1']
    #allocation7 [shape = 'u8[32768]{0}', space=vmem, size = 0x8000, scoped, tag = 'output window, operand 0']
    %12 = vsyncpa [#allocation5], 0
    %13 = vsyncpa [#allocation6], 0
    %s14 = scalar_lea.sflag [#allocation6], 1
    %15 = vsyncpa %s14, 0
    loop: start=0, step=1, limit=8
    $region2: #{tpu_custom_call.1} parent=1 // loop_pre_header
      _
    $region3: #{tpu_custom_call.1} parent=1 // loop_header
      %s17 = sphi 0, %s21
      %p18 = scmp.ge.s32.totalorder %s17, 8
      %s24 = sphi 0, %s36
      %s25 = sphi 0, %s32
      %s26 = sphi 0, %s24
      %s27 = sphi 0, %s25
      %s28 = sphi 0, %s26
      %s29 = sphi 0, %s27
      %s37 = sphi 0, %s37
      %s39 = sphi 0, %s37
      %s40 = sphi 0, %s39
      %s54 = sphi 0, %s40
      %s58 = sphi 0, %s58
      %s60 = sphi 0, %s58
      %s61 = sphi 0, %s60
      %s75 = sphi 0, %s61
      %s79 = sphi 0, %s79
      %s81 = sphi 0, %s79
      %s82 = sphi 0, %s81
      %s96 = sphi 0, %s82
      %s100 = sphi 0, %s100
      %s102 = sphi 0, %s100
      %s103 = sphi 0, %s102
      %s117 = sphi 0, %s103
      %s121 = sphi 0, %s121
      %s123 = sphi 0, %s121
      %s124 = sphi 0, %s123
      %s138 = sphi 0, %s124
      %s142 = sphi 0, %s142
      %s144 = sphi 0, %s142
      %s145 = sphi 0, %s144
      %s159 = sphi 0, %s145
      %s167 = sphi 0, %s169
      %s170 = sphi 0, %s167
      %s171 = sphi 0, %s170
      %s187 = sphi 0, %s171
    $region4: #{tpu_custom_call.1} parent=1 // loop_header_branch
      %20 = sbr.rel (%p18) target = $region8
    $region5: #{tpu_custom_call.1} parent=1 // loop_body
      %s22 = ssub.s32 %s17, 1
      %s23 = ssub.s32 %s17, 2
      %s30 = sadd.s32 1, %s25
      %p31 = scmp.ge.s32.totalorder %s30, 3
      %s32 = scalar_select %p31, 0, %s30
      %s33 = sadd.s32 1, %s24
      %s34 = scalar_select %p31, %s33, %s24
      %p35 = scmp.ge.s32.totalorder %s34, 2
      %s36 = scalar_select %p35, 0, %s34
      %s38 = sadd.s32 %s37, 1
      %p41 = scmp.eq.s32.totalorder %s17, 5
      %p42 = scmp.ne.s32.totalorder %s37, %s39
      %p43 = scmp.eq.s32.totalorder %s17, 0
      %p44 = por %p42, %p43
      %p45 = scmp.ne.s32.totalorder %s37, %s39
      %p46 = scmp.eq.s32.totalorder %s22, 5
      %p47 = por %p45, %p46
      %p48 = scmp.ne.s32.totalorder %s39, %s40
      %p49 = scmp.eq.s32.totalorder %s22, 0
      %p50 = por %p48, %p49
      %p51 = scmp.ne.s32.totalorder %s39, %s40
      %p52 = scmp.eq.s32.totalorder %s23, 5
      %p53 = por %p51, %p52
      %p55 = scmp.ne.s32.totalorder %s40, %s54
      %p56 = scmp.eq.s32.totalorder %s23, 0
      %p57 = por %p55, %p56
      %s59 = sadd.s32 %s58, 1
      %p62 = scmp.eq.s32.totalorder %s17, 5
      %p63 = scmp.ne.s32.totalorder %s58, %s60
      %p64 = scmp.eq.s32.totalorder %s17, 0
      %p65 = por %p63, %p64
      %p66 = scmp.ne.s32.totalorder %s58, %s60
      %p67 = scmp.eq.s32.totalorder %s22, 5
      %p68 = por %p66, %p67
      %p69 = scmp.ne.s32.totalorder %s60, %s61
      %p70 = scmp.eq.s32.totalorder %s22, 0
      %p71 = por %p69, %p70
      %p72 = scmp.ne.s32.totalorder %s60, %s61
      %p73 = scmp.eq.s32.totalorder %s23, 5
      %p74 = por %p72, %p73
      %p76 = scmp.ne.s32.totalorder %s61, %s75
      %p77 = scmp.eq.s32.totalorder %s23, 0
      %p78 = por %p76, %p77
      %s80 = sadd.s32 %s79, 1
      %p83 = scmp.eq.s32.totalorder %s17, 5
      %p84 = scmp.ne.s32.totalorder %s79, %s81
      %p85 = scmp.eq.s32.totalorder %s17, 0
      %p86 = por %p84, %p85
      %p87 = scmp.ne.s32.totalorder %s79, %s81
      %p88 = scmp.eq.s32.totalorder %s22, 5
      %p89 = por %p87, %p88
      %p90 = scmp.ne.s32.totalorder %s81, %s82
      %p91 = scmp.eq.s32.totalorder %s22, 0
      %p92 = por %p90, %p91
      %p93 = scmp.ne.s32.totalorder %s81, %s82
      %p94 = scmp.eq.s32.totalorder %s23, 5
      %p95 = por %p93, %p94
      %p97 = scmp.ne.s32.totalorder %s82, %s96
      %p98 = scmp.eq.s32.totalorder %s23, 0
      %p99 = por %p97, %p98
      %s101 = sadd.s32 %s100, 1
      %p104 = scmp.eq.s32.totalorder %s17, 5
      %p105 = scmp.ne.s32.totalorder %s100, %s102
      %p106 = scmp.eq.s32.totalorder %s17, 0
      %p107 = por %p105, %p106
      %p108 = scmp.ne.s32.totalorder %s100, %s102
      %p109 = scmp.eq.s32.totalorder %s22, 5
      %p110 = por %p108, %p109
      %p111 = scmp.ne.s32.totalorder %s102, %s103
      %p112 = scmp.eq.s32.totalorder %s22, 0
      %p113 = por %p111, %p112
      %p114 = scmp.ne.s32.totalorder %s102, %s103
      %p115 = scmp.eq.s32.totalorder %s23, 5
      %p116 = por %p114, %p115
      %p118 = scmp.ne.s32.totalorder %s103, %s117
      %p119 = scmp.eq.s32.totalorder %s23, 0
      %p120 = por %p118, %p119
      %s122 = sadd.s32 %s121, 1
      %p125 = scmp.eq.s32.totalorder %s17, 5
      %p126 = scmp.ne.s32.totalorder %s121, %s123
      %p127 = scmp.eq.s32.totalorder %s17, 0
      %p128 = por %p126, %p127
      %p129 = scmp.ne.s32.totalorder %s121, %s123
      %p130 = scmp.eq.s32.totalorder %s22, 5
      %p131 = por %p129, %p130
      %p132 = scmp.ne.s32.totalorder %s123, %s124
      %p133 = scmp.eq.s32.totalorder %s22, 0
      %p134 = por %p132, %p133
      %p135 = scmp.ne.s32.totalorder %s123, %s124
      %p136 = scmp.eq.s32.totalorder %s23, 5
      %p137 = por %p135, %p136
      %p139 = scmp.ne.s32.totalorder %s124, %s138
      %p140 = scmp.eq.s32.totalorder %s23, 0
      %p141 = por %p139, %p140
      %s143 = sadd.s32 %s142, 1
      %p146 = scmp.eq.s32.totalorder %s17, 5
      %p147 = scmp.ne.s32.totalorder %s142, %s144
      %p148 = scmp.eq.s32.totalorder %s17, 0
      %p149 = por %p147, %p148
      %p150 = scmp.ne.s32.totalorder %s142, %s144
      %p151 = scmp.eq.s32.totalorder %s22, 5
      %p152 = por %p150, %p151
      %p153 = scmp.ne.s32.totalorder %s144, %s145
      %p154 = scmp.eq.s32.totalorder %s22, 0
      %p155 = por %p153, %p154
      %p156 = scmp.ne.s32.totalorder %s144, %s145
      %p157 = scmp.eq.s32.totalorder %s23, 5
      %p158 = por %p156, %p157
      %p160 = scmp.ne.s32.totalorder %s145, %s159
      %p161 = scmp.eq.s32.totalorder %s23, 0
      %p162 = por %p160, %p161
      %s163 = ssub.s32 %s24, %s36
      %s164 = ssub.s32 %s25, %s32
      %s165 = sor.u32 %s163, %s164
      %p166 = scmp.eq.s32.totalorder %s165, 0
      %s168 = sadd.s32 %s167, 1
      %s169 = scalar_select %p166, %s167, %s168
      %p172 = pneg %p166
      %p173 = scmp.eq.s32.totalorder %s17, 5
      %p174 = por %p172, %p173
      %p175 = scmp.ne.s32.totalorder %s167, %s170
      %p176 = scmp.eq.s32.totalorder %s17, 0
      %p177 = por %p175, %p176
      %p178 = scmp.ne.s32.totalorder %s167, %s170
      %p179 = scmp.eq.s32.totalorder %s22, 5
      %p180 = por %p178, %p179
      %p181 = scmp.ne.s32.totalorder %s170, %s171
      %p182 = scmp.eq.s32.totalorder %s22, 0
      %p183 = por %p181, %p182
      %p184 = scmp.ne.s32.totalorder %s170, %s171
      %p185 = scmp.eq.s32.totalorder %s23, 5
      %p186 = por %p184, %p185
      %p188 = scmp.ne.s32.totalorder %s171, %s187
      %p189 = scmp.eq.s32.totalorder %s23, 0
      %p190 = por %p188, %p189
      %p191 = scmp.le.s32.totalorder 1, %s17
      %p192 = scmp.lt.s32.totalorder %s17, 7
      %p193 = pnand %p191, %p192
      %p194 = pneg %p193
      // Predicated region
      $region9: #{tpu_custom_call.1} parent=5 // pred_check
        _
      $region10: #{tpu_custom_call.1} parent=5 // pred_check_branch
        %196 = sbr.rel (%p193) target = $region12
      $region11: #{tpu_custom_call.1} parent=5 // pred_region
        %s197 = ssub.s32 %s17, 1
        // Predicated region
        $region13: #{tpu_custom_call.1} parent=11 // pred_check
          %p198 = pneg %p50
        $region14: #{tpu_custom_call.1} parent=11 // pred_check_branch
          %200 = sbr.rel (%p198) target = $region16
        $region15: #{tpu_custom_call.1} parent=11 // pred_region
          _
        $region16: #{tpu_custom_call.1} parent=11 // pred_fallthru
          _
        // Predicated region
        $region17: #{tpu_custom_call.1} parent=11 // pred_check
          %p201 = pneg %p71
        $region18: #{tpu_custom_call.1} parent=11 // pred_check_branch
          %203 = sbr.rel (%p201) target = $region20
        $region19: #{tpu_custom_call.1} parent=11 // pred_region
          _
        $region20: #{tpu_custom_call.1} parent=11 // pred_fallthru
          _
        // Predicated region
        $region21: #{tpu_custom_call.1} parent=11 // pred_check
          %p204 = pneg %p92
        $region22: #{tpu_custom_call.1} parent=11 // pred_check_branch
          %206 = sbr.rel (%p204) target = $region24
        $region23: #{tpu_custom_call.1} parent=11 // pred_region
          _
        $region24: #{tpu_custom_call.1} parent=11 // pred_fallthru
          _
        // Predicated region
        $region25: #{tpu_custom_call.1} parent=11 // pred_check
          %p207 = pneg %p113
        $region26: #{tpu_custom_call.1} parent=11 // pred_check_branch
          %209 = sbr.rel (%p207) target = $region28
        $region27: #{tpu_custom_call.1} parent=11 // pred_region
          _
        $region28: #{tpu_custom_call.1} parent=11 // pred_fallthru
          _
        // Predicated region
        $region29: #{tpu_custom_call.1} parent=11 // pred_check
          %p210 = pneg %p134
        $region30: #{tpu_custom_call.1} parent=11 // pred_check_branch
          %212 = sbr.rel (%p210) target = $region32
        $region31: #{tpu_custom_call.1} parent=11 // pred_region
          %s214 = ssub.s32 4096, 4096
          %215 = vsyncadd [#allocation5], %s214
          %s216 = sshll.u32 [#allocation4], 4
          %s217 = int_to_ptr.vmem [resolvable:$true] %s216
          %222 = dma.hbm_to_vmem [thread:$0]  %s5, 4096, %s217, [#allocation5], 64, 64, 4
        $region32: #{tpu_custom_call.1} parent=11 // pred_fallthru
          _
        // Predicated region
        $region33: #{tpu_custom_call.1} parent=11 // pred_check
          %p223 = pneg %p155
        $region34: #{tpu_custom_call.1} parent=11 // pred_check_branch
          %225 = sbr.rel (%p223) target = $region36
        $region35: #{tpu_custom_call.1} parent=11 // pred_region
          _
        $region36: #{tpu_custom_call.1} parent=11 // pred_fallthru
          _
      $region12: #{tpu_custom_call.1} parent=5 // pred_fallthru
        _
      %p226 = scmp.lt.s32.totalorder %s17, 6
      // Predicated region
      $region37: #{tpu_custom_call.1} parent=5 // pred_check
        %p227 = pneg %p226
      $region38: #{tpu_custom_call.1} parent=5 // pred_check_branch
        %229 = sbr.rel (%p227) target = $region40
      $region39: #{tpu_custom_call.1} parent=5 // pred_region
        _
      $region40: #{tpu_custom_call.1} parent=5 // pred_fallthru
        _
      %p230 = scmp.le.s32.totalorder 1, %s17
      %p231 = scmp.lt.s32.totalorder %s17, 7
      %p232 = pnand %p230, %p231
      %p233 = pneg %p232
      // Predicated region
      $region41: #{tpu_custom_call.1} parent=5 // pred_check
        _
      $region42: #{tpu_custom_call.1} parent=5 // pred_check_branch
        %235 = sbr.rel (%p232) target = $region44
      $region43: #{tpu_custom_call.1} parent=5 // pred_region
        %s236 = ssub.s32 %s17, 1
        // Predicated region
        $region45: #{tpu_custom_call.1} parent=43 // pred_check
          %p237 = pneg %p134
        $region46: #{tpu_custom_call.1} parent=43 // pred_check_branch
          %239 = sbr.rel (%p237) target = $region48
        $region47: #{tpu_custom_call.1} parent=43 // pred_region
          %240 = dma.done [#allocation5], 4096
        $region48: #{tpu_custom_call.1} parent=43 // pred_fallthru
          _
        %p241 = pneg %p50
        %p242 = pneg %p47
        %p243 = pneg %p71
        %p244 = pneg %p68
        %p245 = pneg %p92
        %p246 = pneg %p89
        %p247 = pneg %p113
        %p248 = pneg %p110
        %p249 = pneg %p134
        %p250 = pneg %p131
        %p251 = pneg %p155
        %p252 = pneg %p152
        %p253 = pneg %p183
        %p254 = pneg %p180
        %s255 = sand.u32 %s170, 1
        %s256 = scalar_lea.sflag [#allocation6], %s255
        %s257 = sand.u32 %s170, 1
        %s258 = smul.addr %s257, 32
        %s259 = scalar_lea.vmem [#allocation7], %s258
        %s260 = smul.u32 4, %s27
        %s261 = ssub.s32 10, %s260
        %p262 = scmp.lt.s32.totalorder %s261, 4
        %s263 = scalar_select %p262, %s261, 4
        %s264 = smul.u32 128, %s263
        %s270 = sand.u32 %s27, 1
        %p271 = scmp.eq.s32.totalorder %s27, 0
        // Predicated region
        $region49: #{tpu_custom_call.1} parent=43 // pred_check
          %p272 = pneg %p271
        $region50: #{tpu_custom_call.1} parent=43 // pred_check_branch
          %274 = sbr.rel (%p272) target = $region52
        $region51: #{tpu_custom_call.1} parent=43 // pred_region
          %s275 = smul.u32 %s27, 32
          %s276 = smul.u32 %s26, 104
          %s277 = sadd.s32 %s275, %s276
          %s278 = scalar_lea.vmem %s0, %s277
          %s279 = smul.u32 %s270, 40
          %s280 = scalar_lea.vmem [#allocation2], %s279
          %s281 = scalar_lea.sflag [#allocation3], %s270
          %p283 = scmp.lt.u32.totalorder 38, 8
          %p284 = pneg %p283
          // Predicated region
          $region53: #{tpu_custom_call.1} parent=51 // pred_check
            _
          $region54: #{tpu_custom_call.1} parent=51 // pred_check_branch
            %286 = sbr.rel (%p283) target = $region56
          $region55: #{tpu_custom_call.1} parent=51 // pred_region
            %s301 = sand.u32 38, 7
            %p302 = scmp.eq.s32.totalorder %s301, 0
            %p303 = pneg %p302
            // Predicated region
            $region68: #{tpu_custom_call.1} parent=55 // pred_check
              _
            $region69: #{tpu_custom_call.1} parent=55 // pred_check_branch
              %305 = sbr.rel (%p302) target = $region71
            $region70: #{tpu_custom_call.1} parent=55 // pred_region
              %s306 = sand.u32 38, 7
              %s307 = ssub.s32 38, %s306
              %s308 = scalar_lea.vmem %s278, %s307
              %s309 = ssub.s32 38, %s306
              %s310 = scalar_lea.vmem %s280, %s309 [#allocation2]
              loop: start=0, step=1, limit=1
              $region72: #{tpu_custom_call.1} parent=70 // loop_pre_header
                _
              $region73: #{tpu_custom_call.1} parent=70 // loop_header
                %s312 = sphi 0, %s316
                %p313 = scmp.ge.s32.totalorder %s312, 1
                %s317 = sphi %s278, %s278
                %s318 = sphi %s280, %s280
              $region74: #{tpu_custom_call.1} parent=70 // loop_header_branch
                %315 = sbr.rel (%p313) target = $region78
              $region75: #{tpu_custom_call.1} parent=70 // loop_body
                %v319 = vld [vmem:[%s317] sm:$0xff]
                %320 = vst [vmem:[%s318] sm:$0xff] %v319
                %v321 = vld [vmem:[%s317 + $0x8] sm:$0xff]
                %322 = vst [vmem:[%s318 + $0x8] sm:$0xff] %v321
                %v323 = vld [vmem:[%s317 + $0x10] sm:$0xff]
                %324 = vst [vmem:[%s318 + $0x10] sm:$0xff] %v323
                %v325 = vld [vmem:[%s317 + $0x18] sm:$0xff]
                %326 = vst [vmem:[%s318 + $0x18] sm:$0xff] %v325
              $region76: #{tpu_custom_call.1} parent=70 // loop_footer
                %s316 = sadd.s32 1, %s312
              $region77: #{tpu_custom_call.1} parent=70 // loop_footer_branch
                %311 = sbr.rel target = $region73
              $region78: #{tpu_custom_call.1} parent=70 // loop_exit
                _
              %s327 = sshllo.u32 0, %s306
              loop: start=0, step=1, limit=1
              $region79: #{tpu_custom_call.1} parent=70 // loop_pre_header
                _
              $region80: #{tpu_custom_call.1} parent=70 // loop_header
                %s329 = sphi 0, %s333
                %p330 = scmp.ge.s32.totalorder %s329, 1
                %s334 = sphi %s308, %s308
                %s335 = sphi %s310, %s310
              $region81: #{tpu_custom_call.1} parent=70 // loop_header_branch
                %332 = sbr.rel (%p330) target = $region85
              $region82: #{tpu_custom_call.1} parent=70 // loop_body
                %v336 = vld [vmem:[%s334] sm:%s327]
                %337 = vst [vmem:[%s335] sm:%s327] %v336
              $region83: #{tpu_custom_call.1} parent=70 // loop_footer
                %s333 = sadd.s32 1, %s329
              $region84: #{tpu_custom_call.1} parent=70 // loop_footer_branch
                %328 = sbr.rel target = $region80
              $region85: #{tpu_custom_call.1} parent=70 // loop_exit
                _
            $region71: #{tpu_custom_call.1} parent=55 // pred_fallthru
              _
          $region56: #{tpu_custom_call.1} parent=51 // pred_fallthru
            _
          // Predicated region
          $region57: #{tpu_custom_call.1} parent=51 // pred_check
            %p287 = pneg %p283
          $region58: #{tpu_custom_call.1} parent=51 // pred_check_branch
            %289 = sbr.rel (%p287) target = $region60
          $region59: #{tpu_custom_call.1} parent=51 // pred_region
            %s290 = sshllo.u32 0, 38
            loop: start=0, step=1, limit=1
            $region61: #{tpu_custom_call.1} parent=59 // loop_pre_header
              _
            $region62: #{tpu_custom_call.1} parent=59 // loop_header
              %s292 = sphi 0, %s296
              %p293 = scmp.ge.s32.totalorder %s292, 1
              %s297 = sphi %s278, %s278
              %s298 = sphi %s280, %s280
            $region63: #{tpu_custom_call.1} parent=59 // loop_header_branch
              %295 = sbr.rel (%p293) target = $region67
            $region64: #{tpu_custom_call.1} parent=59 // loop_body
              %v299 = vld [vmem:[%s297] sm:%s290]
              %300 = vst [vmem:[%s298] sm:%s290] %v299
            $region65: #{tpu_custom_call.1} parent=59 // loop_footer
              %s296 = sadd.s32 1, %s292
            $region66: #{tpu_custom_call.1} parent=59 // loop_footer_branch
              %291 = sbr.rel target = $region62
            $region67: #{tpu_custom_call.1} parent=59 // loop_exit
              _
          $region60: #{tpu_custom_call.1} parent=51 // pred_fallthru
            _
          // Predicated region
          $region86: #{tpu_custom_call.1} parent=51 // pred_check
            _
          $region87: #{tpu_custom_call.1} parent=51 // pred_check_branch
            %340 = sbr.rel (0) target = $region89
          $region88: #{tpu_custom_call.1} parent=51 // pred_region
            %341 = vsyncadd %s281, 608
          $region89: #{tpu_custom_call.1} parent=51 // pred_fallthru
            _
        $region52: #{tpu_custom_call.1} parent=43 // pred_fallthru
          _
        %s342 = sadd.s32 %s27, 1
        %p343 = scmp.lt.s32.totalorder %s342, 3
        // Predicated region
        $region90: #{tpu_custom_call.1} parent=43 // pred_check
          %p344 = pneg %p343
        $region91: #{tpu_custom_call.1} parent=43 // pred_check_branch
          %346 = sbr.rel (%p344) target = $region93
        $region92: #{tpu_custom_call.1} parent=43 // pred_region
          %s347 = ssub.s32 1, %s270
          %s348 = smul.u32 %s342, 32
          %s349 = smul.u32 %s26, 104
          %s350 = sadd.s32 %s348, %s349
          %s351 = scalar_lea.vmem %s0, %s350
          %s352 = smul.u32 %s347, 40
          %s353 = scalar_lea.vmem [#allocation2], %s352
          %s354 = scalar_lea.sflag [#allocation3], %s347
          %p356 = scmp.lt.u32.totalorder 38, 8
          %p357 = pneg %p356
          // Predicated region
          $region94: #{tpu_custom_call.1} parent=92 // pred_check
            _
          $region95: #{tpu_custom_call.1} parent=92 // pred_check_branch
            %359 = sbr.rel (%p356) target = $region97
          $region96: #{tpu_custom_call.1} parent=92 // pred_region
            %s374 = sand.u32 38, 7
            %p375 = scmp.eq.s32.totalorder %s374, 0
            %p376 = pneg %p375
            // Predicated region
            $region109: #{tpu_custom_call.1} parent=96 // pred_check
              _
            $region110: #{tpu_custom_call.1} parent=96 // pred_check_branch
              %378 = sbr.rel (%p375) target = $region112
            $region111: #{tpu_custom_call.1} parent=96 // pred_region
              %s379 = sand.u32 38, 7
              %s380 = ssub.s32 38, %s379
              %s381 = scalar_lea.vmem %s351, %s380
              %s382 = ssub.s32 38, %s379
              %s383 = scalar_lea.vmem %s353, %s382 [#allocation2]
              loop: start=0, step=1, limit=1
              $region113: #{tpu_custom_call.1} parent=111 // loop_pre_header
                _
              $region114: #{tpu_custom_call.1} parent=111 // loop_header
                %s385 = sphi 0, %s389
                %p386 = scmp.ge.s32.totalorder %s385, 1
                %s390 = sphi %s351, %s351
                %s391 = sphi %s353, %s353
              $region115: #{tpu_custom_call.1} parent=111 // loop_header_branch
                %388 = sbr.rel (%p386) target = $region119
              $region116: #{tpu_custom_call.1} parent=111 // loop_body
                %v392 = vld [vmem:[%s390] sm:$0xff]
                %393 = vst [vmem:[%s391] sm:$0xff] %v392
                %v394 = vld [vmem:[%s390 + $0x8] sm:$0xff]
                %395 = vst [vmem:[%s391 + $0x8] sm:$0xff] %v394
                %v396 = vld [vmem:[%s390 + $0x10] sm:$0xff]
                %397 = vst [vmem:[%s391 + $0x10] sm:$0xff] %v396
                %v398 = vld [vmem:[%s390 + $0x18] sm:$0xff]
                %399 = vst [vmem:[%s391 + $0x18] sm:$0xff] %v398
              $region117: #{tpu_custom_call.1} parent=111 // loop_footer
                %s389 = sadd.s32 1, %s385
              $region118: #{tpu_custom_call.1} parent=111 // loop_footer_branch
                %384 = sbr.rel target = $region114
              $region119: #{tpu_custom_call.1} parent=111 // loop_exit
                _
              %s400 = sshllo.u32 0, %s379
              loop: start=0, step=1, limit=1
              $region120: #{tpu_custom_call.1} parent=111 // loop_pre_header
                _
              $region121: #{tpu_custom_call.1} parent=111 // loop_header
                %s402 = sphi 0, %s406
                %p403 = scmp.ge.s32.totalorder %s402, 1
                %s407 = sphi %s381, %s381
                %s408 = sphi %s383, %s383
              $region122: #{tpu_custom_call.1} parent=111 // loop_header_branch
                %405 = sbr.rel (%p403) target = $region126
              $region123: #{tpu_custom_call.1} parent=111 // loop_body
                %v409 = vld [vmem:[%s407] sm:%s400]
                %410 = vst [vmem:[%s408] sm:%s400] %v409
              $region124: #{tpu_custom_call.1} parent=111 // loop_footer
                %s406 = sadd.s32 1, %s402
              $region125: #{tpu_custom_call.1} parent=111 // loop_footer_branch
                %401 = sbr.rel target = $region121
              $region126: #{tpu_custom_call.1} parent=111 // loop_exit
                _
            $region112: #{tpu_custom_call.1} parent=96 // pred_fallthru
              _
          $region97: #{tpu_custom_call.1} parent=92 // pred_fallthru
            _
          // Predicated region
          $region98: #{tpu_custom_call.1} parent=92 // pred_check
            %p360 = pneg %p356
          $region99: #{tpu_custom_call.1} parent=92 // pred_check_branch
            %362 = sbr.rel (%p360) target = $region101
          $region100: #{tpu_custom_call.1} parent=92 // pred_region
            %s363 = sshllo.u32 0, 38
            loop: start=0, step=1, limit=1
            $region102: #{tpu_custom_call.1} parent=100 // loop_pre_header
              _
            $region103: #{tpu_custom_call.1} parent=100 // loop_header
              %s365 = sphi 0, %s369
              %p366 = scmp.ge.s32.totalorder %s365, 1
              %s370 = sphi %s351, %s351
              %s371 = sphi %s353, %s353
            $region104: #{tpu_custom_call.1} parent=100 // loop_header_branch
              %368 = sbr.rel (%p366) target = $region108
            $region105: #{tpu_custom_call.1} parent=100 // loop_body
              %v372 = vld [vmem:[%s370] sm:%s363]
              %373 = vst [vmem:[%s371] sm:%s363] %v372
            $region106: #{tpu_custom_call.1} parent=100 // loop_footer
              %s369 = sadd.s32 1, %s365
            $region107: #{tpu_custom_call.1} parent=100 // loop_footer_branch
              %364 = sbr.rel target = $region103
            $region108: #{tpu_custom_call.1} parent=100 // loop_exit
              _
          $region101: #{tpu_custom_call.1} parent=92 // pred_fallthru
            _
          // Predicated region
          $region127: #{tpu_custom_call.1} parent=92 // pred_check
            _
          $region128: #{tpu_custom_call.1} parent=92 // pred_check_branch
            %413 = sbr.rel (0) target = $region130
          $region129: #{tpu_custom_call.1} parent=92 // pred_region
            %414 = vsyncadd %s354, 608
          $region130: #{tpu_custom_call.1} parent=92 // pred_fallthru
            _
        $region93: #{tpu_custom_call.1} parent=43 // pred_fallthru
          _
        %s415 = smul.u32 %s270, 40
        %s416 = scalar_lea.vmem [#allocation2], %s415
        %s417 = scalar_lea.sflag [#allocation3], %s270
        %s418 = smul.u32 38, 1
        %s419 = sshll.u32 %s418, 4
        %420 = dma.done %s417, %s419
        %v421 = vld [vmem:[%s416] sm:$0xff]
        %v422 = vld [vmem:[%s416 + $0x8] sm:$0xff]
        %v423 = vld [vmem:[%s416 + $0x10] sm:$0xff]
        %v424 = vld [vmem:[%s416 + $0x18] sm:$0xff]
        %v425 = vld [vmem:[%s1] sm:$0x1]
        %v426 = vlaneseq
        %v427 = vshrl.u32 %v426, 7
        %v428 = vsub.s32 0, %v427
        %v429 = vrot.slane %v425, %v428
        %v430 = vmul.f32 %v421, %v429
        %v431 = vmul.f32 %v422, %v429
        %v432 = vmul.f32 %v423, %v429
        %v433 = vmul.f32 %v424, %v429
        %v434 = vld [vmem:[%s416 + $0x1] sm:$0xff]
        %v435 = vld [vmem:[%s416 + $0x9] sm:$0xff]
        %v436 = vld [vmem:[%s416 + $0x11] sm:$0xff]
        %v437 = vld [vmem:[%s416 + $0x19] sm:$0xff]
        %v438 = vld [vmem:[%s1 + $0x1] sm:$0x1]
        %v439 = vlaneseq
        %v440 = vshrl.u32 %v439, 7
        %v441 = vsub.s32 0, %v440
        %v442 = vrot.slane %v438, %v441
        %v443 = vmul.f32 %v434, %v442
        %v444 = vmul.f32 %v435, %v442
        %v445 = vmul.f32 %v436, %v442
        %v446 = vmul.f32 %v437, %v442
        %v447 = vadd.f32 %v430, %v443
        %v448 = vadd.f32 %v431, %v444
        %v449 = vadd.f32 %v432, %v445
        %v450 = vadd.f32 %v433, %v446
        %v451 = vld [vmem:[%s416 + $0x2] sm:$0xff]
        %v452 = vld [vmem:[%s416 + $0xa] sm:$0xff]
        %v453 = vld [vmem:[%s416 + $0x12] sm:$0xff]
        %v454 = vld [vmem:[%s416 + $0x1a] sm:$0xff]
        %v455 = vld [vmem:[%s1 + $0x2] sm:$0x1]
        %v456 = vlaneseq
        %v457 = vshrl.u32 %v456, 7
        %v458 = vsub.s32 0, %v457
        %v459 = vrot.slane %v455, %v458
        %v460 = vmul.f32 %v451, %v459
        %v461 = vmul.f32 %v452, %v459
        %v462 = vmul.f32 %v453, %v459
        %v463 = vmul.f32 %v454, %v459
        %v464 = vadd.f32 %v447, %v460
        %v465 = vadd.f32 %v448, %v461
        %v466 = vadd.f32 %v449, %v462
        %v467 = vadd.f32 %v450, %v463
        %v468 = vld [vmem:[%s416 + $0x3] sm:$0xff]
        %v469 = vld [vmem:[%s416 + $0xb] sm:$0xff]
        %v470 = vld [vmem:[%s416 + $0x13] sm:$0xff]
        %v471 = vld [vmem:[%s416 + $0x1b] sm:$0xff]
        %v472 = vld [vmem:[%s1 + $0x3] sm:$0x1]
        %v473 = vlaneseq
        %v474 = vshrl.u32 %v473, 7
        %v475 = vsub.s32 0, %v474
        %v476 = vrot.slane %v472, %v475
        %v477 = vmul.f32 %v468, %v476
        %v478 = vmul.f32 %v469, %v476
        %v479 = vmul.f32 %v470, %v476
        %v480 = vmul.f32 %v471, %v476
        %v481 = vadd.f32 %v464, %v477
        %v482 = vadd.f32 %v465, %v478
        %v483 = vadd.f32 %v466, %v479
        %v484 = vadd.f32 %v467, %v480
        %v485 = vld [vmem:[%s416 + $0x4] sm:$0xff]
        %v486 = vld [vmem:[%s416 + $0xc] sm:$0xff]
        %v487 = vld [vmem:[%s416 + $0x14] sm:$0xff]
        %v488 = vld [vmem:[%s416 + $0x1c] sm:$0xff]
        %v489 = vld [vmem:[%s1 + $0x4] sm:$0x1]
        %v490 = vlaneseq
        %v491 = vshrl.u32 %v490, 7
        %v492 = vsub.s32 0, %v491
        %v493 = vrot.slane %v489, %v492
        %v494 = vmul.f32 %v485, %v493
        %v495 = vmul.f32 %v486, %v493
        %v496 = vmul.f32 %v487, %v493
        %v497 = vmul.f32 %v488, %v493
        %v498 = vadd.f32 %v481, %v494
        %v499 = vadd.f32 %v482, %v495
        %v500 = vadd.f32 %v483, %v496
        %v501 = vadd.f32 %v484, %v497
        %v502 = vld [vmem:[%s416 + $0x5] sm:$0xff]
        %v503 = vld [vmem:[%s416 + $0xd] sm:$0xff]
        %v504 = vld [vmem:[%s416 + $0x15] sm:$0xff]
        %v505 = vld [vmem:[%s416 + $0x1d] sm:$0xff]
        %v506 = vld [vmem:[%s1 + $0x5] sm:$0x1]
        %v507 = vlaneseq
        %v508 = vshrl.u32 %v507, 7
        %v509 = vsub.s32 0, %v508
        %v510 = vrot.slane %v506, %v509
        %v511 = vmul.f32 %v502, %v510
        %v512 = vmul.f32 %v503, %v510
        %v513 = vmul.f32 %v504, %v510
        %v514 = vmul.f32 %v505, %v510
        %v515 = vadd.f32 %v498, %v511
        %v516 = vadd.f32 %v499, %v512
        %v517 = vadd.f32 %v500, %v513
        %v518 = vadd.f32 %v501, %v514
        %v519 = vld [vmem:[%s416 + $0x6] sm:$0xff]
        %v520 = vld [vmem:[%s416 + $0xe] sm:$0xff]
        %v521 = vld [vmem:[%s416 + $0x16] sm:$0xff]
        %v522 = vld [vmem:[%s416 + $0x1e] sm:$0xff]
        %v523 = vld [vmem:[%s1 + $0x6] sm:$0x1]
        %v524 = vlaneseq
        %v525 = vshrl.u32 %v524, 7
        %v526 = vsub.s32 0, %v525
        %v527 = vrot.slane %v523, %v526
        %v528 = vmul.f32 %v519, %v527
        %v529 = vmul.f32 %v520, %v527
        %v530 = vmul.f32 %v521, %v527
        %v531 = vmul.f32 %v522, %v527
        %v532 = vadd.f32 %v515, %v528
        %v533 = vadd.f32 %v516, %v529
        %v534 = vadd.f32 %v517, %v530
        %v535 = vadd.f32 %v518, %v531
        %v536 = vld [vmem:[%s2] sm:$0x1]
        %v538 = vlaneseq
        %v539 = vshrl.u32 %v538, 7
        %v540 = vsub.s32 0, %v539
        %v541 = vrot.slane %v536, %v540
        %v543 = vadd.f32 %v532, %v541
        %v544 = vadd.f32 %v533, %v541
        %v545 = vadd.f32 %v534, %v541
        %v546 = vadd.f32 %v535, %v541
        %547 = vadd.xlane.f32.xlu0 %v543
        %v548 = vpop.xlane.xlu0 %547
        %549 = vadd.xlane.f32.xlu0 %v544
        %v550 = vpop.xlane.xlu0 %549
        %551 = vadd.xlane.f32.xlu0 %v545
        %v552 = vpop.xlane.xlu0 %551
        %553 = vadd.xlane.f32.xlu0 %v546
        %v554 = vpop.xlane.xlu0 %553
        %v555 = vmul.f32 %v548, 0.0078125
        %v556 = vmul.f32 %v550, 0.0078125
        %v557 = vmul.f32 %v552, 0.0078125
        %v558 = vmul.f32 %v554, 0.0078125
        %v559 = vsub.f32 %v543, %v555
        %v560 = vsub.f32 %v544, %v556
        %v561 = vsub.f32 %v545, %v557
        %v562 = vsub.f32 %v546, %v558
        %v563 = vmul.f32 %v559, %v559
        %v564 = vmul.f32 %v560, %v560
        %v565 = vmul.f32 %v561, %v561
        %v566 = vmul.f32 %v562, %v562
        %567 = vadd.xlane.f32.xlu0 %v563
        %v568 = vpop.xlane.xlu0 %567
        %569 = vadd.xlane.f32.xlu0 %v564
        %v570 = vpop.xlane.xlu0 %569
        %571 = vadd.xlane.f32.xlu0 %v565
        %v572 = vpop.xlane.xlu0 %571
        %573 = vadd.xlane.f32.xlu0 %v566
        %v574 = vpop.xlane.xlu0 %573
        %v575 = vmul.f32 %v568, 0.0078125
        %v576 = vmul.f32 %v570, 0.0078125
        %v577 = vmul.f32 %v572, 0.0078125
        %v578 = vmul.f32 %v574, 0.0078125
        %v579 = vadd.f32 %v575, 1e-06
        %v580 = vadd.f32 %v576, 1e-06
        %v581 = vadd.f32 %v577, 1e-06
        %v582 = vadd.f32 %v578, 1e-06
        %v583 = vrsqrt.pop %v579
        %v584 = vrsqrt.pop %v580
        %v585 = vrsqrt.pop %v581
        %v586 = vrsqrt.pop %v582
        %v587 = vmul.f32 %v559, %v583
        %v588 = vmul.f32 %v560, %v584
        %v589 = vmul.f32 %v561, %v585
        %v590 = vmul.f32 %v562, %v586
        %v591 = vpack.c.bf16 %v588, %v587
        %v592 = vpack.c.bf16 %v590, %v589
        %v593 = vld [vmem:[%s3] sm:$0xff]
        %v594 = vld [vmem:[%s3 + $0x8] sm:$0xff]
        %v595 = vld [vmem:[%s3 + $0x10] sm:$0xff]
        %v596 = vld [vmem:[%s3 + $0x18] sm:$0xff]
        %v597 = vld [vmem:[%s3 + $0x20] sm:$0xff]
        %v598 = vld [vmem:[%s3 + $0x28] sm:$0xff]
        %v599 = vld [vmem:[%s3 + $0x30] sm:$0xff]
        %v600 = vld [vmem:[%s3 + $0x38] sm:$0xff]
        %v601 = vld [vmem:[%s3 + $0x40] sm:$0xff]
        %v602 = vld [vmem:[%s3 + $0x48] sm:$0xff]
        %v603 = vld [vmem:[%s3 + $0x50] sm:$0xff]
        %v604 = vld [vmem:[%s3 + $0x58] sm:$0xff]
        %v605 = vld [vmem:[%s3 + $0x60] sm:$0xff]
        %v606 = vld [vmem:[%s3 + $0x68] sm:$0xff]
        %v607 = vld [vmem:[%s3 + $0x70] sm:$0xff]
        %v608 = vld [vmem:[%s3 + $0x78] sm:$0xff]
        %v609 = vld [vmem:[%s3 + $0x80] sm:$0xff]
        %v610 = vld [vmem:[%s3 + $0x88] sm:$0xff]
        %v611 = vld [vmem:[%s3 + $0x90] sm:$0xff]
        %v612 = vld [vmem:[%s3 + $0x98] sm:$0xff]
        %v613 = vld [vmem:[%s3 + $0xa0] sm:$0xff]
        %v614 = vld [vmem:[%s3 + $0xa8] sm:$0xff]
        %v615 = vld [vmem:[%s3 + $0xb0] sm:$0xff]
        %v616 = vld [vmem:[%s3 + $0xb8] sm:$0xff]
        %v617 = vld [vmem:[%s3 + $0xc0] sm:$0xff]
        %v618 = vld [vmem:[%s3 + $0xc8] sm:$0xff]
        %v619 = vld [vmem:[%s3 + $0xd0] sm:$0xff]
        %v620 = vld [vmem:[%s3 + $0xd8] sm:$0xff]
        %v621 = vld [vmem:[%s3 + $0xe0] sm:$0xff]
        %v622 = vld [vmem:[%s3 + $0xe8] sm:$0xff]
        %v623 = vld [vmem:[%s3 + $0xf0] sm:$0xff]
        %v624 = vld [vmem:[%s3 + $0xf8] sm:$0xff]
        %v625 = vld [vmem:[%s4] sm:$0xf]
        %v627 = vlaneseq
        %v628 = vshrl.u32 %v627, 7
        %v629 = vsub.s32 0, %v628
        %v630 = vrot.slane %v625, %v629
        %v631 = vlaneseq
        %v632 = vshrl.u32 %v631, 7
        %v633 = vsub.s32 1, %v632
        %v634 = vrot.slane %v625, %v633
        %v635 = vlaneseq
        %v636 = vshrl.u32 %v635, 7
        %v637 = vsub.s32 2, %v636
        %v638 = vrot.slane %v625, %v637
        %v639 = vlaneseq
        %v640 = vshrl.u32 %v639, 7
        %v641 = vsub.s32 3, %v640
        %v642 = vrot.slane %v625, %v641
        %v679 = vunpack.c.l.b16 %v593
        %v680 = vunpack.c.h.b16 %v593
        %v681 = vunpack.c.l.b16 %v594
        %v682 = vunpack.c.h.b16 %v594
        %v683 = vunpack.c.l.b16 %v595
        %v684 = vunpack.c.h.b16 %v595
        %v685 = vunpack.c.l.b16 %v596
        %v686 = vunpack.c.h.b16 %v596
        %v687 = vunpack.c.l.b16 %v597
        %v688 = vunpack.c.h.b16 %v597
        %v689 = vunpack.c.l.b16 %v598
        %v690 = vunpack.c.h.b16 %v598
        %v691 = vunpack.c.l.b16 %v599
        %v692 = vunpack.c.h.b16 %v599
        %v693 = vunpack.c.l.b16 %v600
        %v694 = vunpack.c.h.b16 %v600
        %v695 = vunpack.c.l.b16 %v601
        %v696 = vunpack.c.h.b16 %v601
        %v697 = vunpack.c.l.b16 %v602
        %v698 = vunpack.c.h.b16 %v602
        %v699 = vunpack.c.l.b16 %v603
        %v700 = vunpack.c.h.b16 %v603
        %v701 = vunpack.c.l.b16 %v604
        %v702 = vunpack.c.h.b16 %v604
        %v703 = vunpack.c.l.b16 %v605
        %v704 = vunpack.c.h.b16 %v605
        %v705 = vunpack.c.l.b16 %v606
        %v706 = vunpack.c.h.b16 %v606
        %v707 = vunpack.c.l.b16 %v607
        %v708 = vunpack.c.h.b16 %v607
        %v709 = vunpack.c.l.b16 %v608
        %v710 = vunpack.c.h.b16 %v608
        %v711 = vunpack.c.l.b16 %v609
        %v712 = vunpack.c.h.b16 %v609
        %v713 = vunpack.c.l.b16 %v610
        %v714 = vunpack.c.h.b16 %v610
        %v715 = vunpack.c.l.b16 %v611
        %v716 = vunpack.c.h.b16 %v611
        %v717 = vunpack.c.l.b16 %v612
        %v718 = vunpack.c.h.b16 %v612
        %v719 = vunpack.c.l.b16 %v613
        %v720 = vunpack.c.h.b16 %v613
        %v721 = vunpack.c.l.b16 %v614
        %v722 = vunpack.c.h.b16 %v614
        %v723 = vunpack.c.l.b16 %v615
        %v724 = vunpack.c.h.b16 %v615
        %v725 = vunpack.c.l.b16 %v616
        %v726 = vunpack.c.h.b16 %v616
        %v727 = vunpack.c.l.b16 %v617
        %v728 = vunpack.c.h.b16 %v617
        %v729 = vunpack.c.l.b16 %v618
        %v730 = vunpack.c.h.b16 %v618
        %v731 = vunpack.c.l.b16 %v619
        %v732 = vunpack.c.h.b16 %v619
        %v733 = vunpack.c.l.b16 %v620
        %v734 = vunpack.c.h.b16 %v620
        %v735 = vunpack.c.l.b16 %v621
        %v736 = vunpack.c.h.b16 %v621
        %v737 = vunpack.c.l.b16 %v622
        %v738 = vunpack.c.h.b16 %v622
        %v739 = vunpack.c.l.b16 %v623
        %v740 = vunpack.c.h.b16 %v623
        %v741 = vunpack.c.l.b16 %v624
        %v742 = vunpack.c.h.b16 %v624
        %v743 = vpack.c.b16 %v683, %v679
        %v744 = vpack.c.b16 %v684, %v680
        %v745 = vpack.c.b16 %v685, %v681
        %v746 = vpack.c.b16 %v686, %v682
        %v747 = vpack.c.b16 %v691, %v687
        %v748 = vpack.c.b16 %v692, %v688
        %v749 = vpack.c.b16 %v693, %v689
        %v750 = vpack.c.b16 %v694, %v690
        %v751 = vpack.c.b16 %v699, %v695
        %v752 = vpack.c.b16 %v700, %v696
        %v753 = vpack.c.b16 %v701, %v697
        %v754 = vpack.c.b16 %v702, %v698
        %v755 = vpack.c.b16 %v707, %v703
        %v756 = vpack.c.b16 %v708, %v704
        %v757 = vpack.c.b16 %v709, %v705
        %v758 = vpack.c.b16 %v710, %v706
        %v759 = vpack.c.b16 %v715, %v711
        %v760 = vpack.c.b16 %v716, %v712
        %v761 = vpack.c.b16 %v717, %v713
        %v762 = vpack.c.b16 %v718, %v714
        %v763 = vpack.c.b16 %v723, %v719
        %v764 = vpack.c.b16 %v724, %v720
        %v765 = vpack.c.b16 %v725, %v721
        %v766 = vpack.c.b16 %v726, %v722
        %v767 = vpack.c.b16 %v731, %v727
        %v768 = vpack.c.b16 %v732, %v728
        %v769 = vpack.c.b16 %v733, %v729
        %v770 = vpack.c.b16 %v734, %v730
        %v771 = vpack.c.b16 %v739, %v735
        %v772 = vpack.c.b16 %v740, %v736
        %v773 = vpack.c.b16 %v741, %v737
        %v774 = vpack.c.b16 %v742, %v738
        %807 = vmatprep.subr.bf16.mxu0 %v744
        %808 = vmatpush1.bf16.msra.mxu0 %v743
        %809 = vmatprep.subr.bf16.mxu0 %v748
        %810 = vmatpush1.bf16.msra.mxu0 %v747
        %811 = vmatprep.subr.bf16.mxu0 %v752
        %812 = vmatpush1.bf16.msra.mxu0 %v751
        %813 = vmatprep.subr.bf16.mxu0 %v756
        %814 = vmatpush1.bf16.msra.mxu0 %v755
        %815 = vmatprep.subr.bf16.mxu0 %v760
        %816 = vmatpush1.bf16.msra.mxu0 %v759
        %817 = vmatprep.subr.bf16.mxu0 %v764
        %818 = vmatpush1.bf16.msra.mxu0 %v763
        %819 = vmatprep.subr.bf16.mxu0 %v768
        %820 = vmatpush1.bf16.msra.mxu0 %v767
        %821 = vmatprep.subr.bf16.mxu0 %v772
        %822 = vmatpush1.bf16.msra.mxu0 %v771
        %823 = vmatprep.subr.bf16.mxu0 0
        %824 = vmatpush1.bf16.msra.mxu0 0
        %825 = vmatprep.subr.bf16.mxu0 0
        %826 = vmatpush1.bf16.msra.mxu0 0
        %827 = vmatprep.subr.bf16.mxu0 0
        %828 = vmatpush1.bf16.msra.mxu0 0
        %829 = vmatprep.subr.bf16.mxu0 0
        %830 = vmatpush1.bf16.msra.mxu0 0
        %831 = vmatprep.subr.bf16.mxu0 0
        %832 = vmatpush1.bf16.msra.mxu0 0
        %833 = vmatprep.subr.bf16.mxu0 0
        %834 = vmatpush1.bf16.msra.mxu0 0
        %835 = vmatprep.subr.bf16.mxu0 0
        %836 = vmatpush1.bf16.msra.mxu0 0
        %837 = vmatprep.subr.bf16.mxu0 0
        %838 = vmatpush1.bf16.msra.mxu0 0
        %839 = vmatprep.mubr.bf16.mxu0 0
        %840 = vmatmul.mubr.bf16.gmra.mrb[0].mxu0 %v591
        %v841 = vpop.f32.mrb[0].mxu0
        %v842 = vadd.f32 %v630, %v841
        %v843 = vpop.f32.mrb[0].mxu0
        %v844 = vadd.f32 %v634, %v843
        %v845 = vpop.f32.mrb[0].mxu0
        %v846 = vadd.f32 %v630, %v845
        %v847 = vpop.f32.mrb[0].mxu0
        %v848 = vadd.f32 %v634, %v847
        %849 = vmatprep.mubr.bf16.mxu0 0
        %850 = vmatmul.mubr.bf16.gmra.mrb[0].mxu0 %v592
        %v851 = vpop.f32.mrb[0].mxu0
        %v852 = vadd.f32 %v630, %v851
        %v853 = vpop.f32.mrb[0].mxu0
        %v854 = vadd.f32 %v634, %v853
        %v855 = vpop.f32.mrb[0].mxu0
        %v856 = vadd.f32 %v630, %v855
        %v857 = vpop.f32.mrb[0].mxu0
        %v858 = vadd.f32 %v634, %v857
        %859 = vdwg.mxu0
        %860 = vmatprep.subr.bf16.mxu0 %v746
        %861 = vmatpush1.bf16.msra.mxu0 %v745
        %862 = vmatprep.subr.bf16.mxu0 %v750
        %863 = vmatpush1.bf16.msra.mxu0 %v749
        %864 = vmatprep.subr.bf16.mxu0 %v754
        %865 = vmatpush1.bf16.msra.mxu0 %v753
        %866 = vmatprep.subr.bf16.mxu0 %v758
        %867 = vmatpush1.bf16.msra.mxu0 %v757
        %868 = vmatprep.subr.bf16.mxu0 %v762
        %869 = vmatpush1.bf16.msra.mxu0 %v761
        %870 = vmatprep.subr.bf16.mxu0 %v766
        %871 = vmatpush1.bf16.msra.mxu0 %v765
        %872 = vmatprep.subr.bf16.mxu0 %v770
        %873 = vmatpush1.bf16.msra.mxu0 %v769
        %874 = vmatprep.subr.bf16.mxu0 %v774
        %875 = vmatpush1.bf16.msra.mxu0 %v773
        %876 = vmatprep.subr.bf16.mxu0 0
        %877 = vmatpush1.bf16.msra.mxu0 0
        %878 = vmatprep.subr.bf16.mxu0 0
        %879 = vmatpush1.bf16.msra.mxu0 0
        %880 = vmatprep.subr.bf16.mxu0 0
        %881 = vmatpush1.bf16.msra.mxu0 0
        %882 = vmatprep.subr.bf16.mxu0 0
        %883 = vmatpush1.bf16.msra.mxu0 0
        %884 = vmatprep.subr.bf16.mxu0 0
        %885 = vmatpush1.bf16.msra.mxu0 0
        %886 = vmatprep.subr.bf16.mxu0 0
        %887 = vmatpush1.bf16.msra.mxu0 0
        %888 = vmatprep.subr.bf16.mxu0 0
        %889 = vmatpush1.bf16.msra.mxu0 0
        %890 = vmatprep.subr.bf16.mxu0 0
        %891 = vmatpush1.bf16.msra.mxu0 0
        %892 = vmatprep.mubr.bf16.mxu0 0
        %893 = vmatmul.mubr.bf16.gmra.mrb[0].mxu0 %v591
        %v894 = vpop.f32.mrb[0].mxu0
        %v895 = vadd.f32 %v638, %v894
        %v896 = vpop.f32.mrb[0].mxu0
        %v897 = vadd.f32 %v642, %v896
        %v898 = vpop.f32.mrb[0].mxu0
        %v899 = vadd.f32 %v638, %v898
        %v900 = vpop.f32.mrb[0].mxu0
        %v901 = vadd.f32 %v642, %v900
        %902 = vmatprep.mubr.bf16.mxu0 0
        %903 = vmatmul.mubr.bf16.gmra.mrb[0].mxu0 %v592
        %v904 = vpop.f32.mrb[0].mxu0
        %v905 = vadd.f32 %v638, %v904
        %v906 = vpop.f32.mrb[0].mxu0
        %v907 = vadd.f32 %v642, %v906
        %v908 = vpop.f32.mrb[0].mxu0
        %v909 = vadd.f32 %v638, %v908
        %v910 = vpop.f32.mrb[0].mxu0
        %v911 = vadd.f32 %v642, %v910
        %912 = vdwg.mxu0
        %v913 = vpack.c.bf16 %v846, %v842
        %v914 = vpack.c.bf16 %v848, %v844
        %v915 = vpack.c.bf16 %v899, %v895
        %v916 = vpack.c.bf16 %v901, %v897
        %v917 = vpack.c.bf16 %v856, %v852
        %v918 = vpack.c.bf16 %v858, %v854
        %v919 = vpack.c.bf16 %v909, %v905
        %v920 = vpack.c.bf16 %v911, %v907
        %v921 = vmul.bf16 %v913, %v913
        %v922 = vmul.bf16 %v914, %v914
        %v923 = vmul.bf16 %v915, %v915
        %v924 = vmul.bf16 %v916, %v916
        %v925 = vmul.bf16 %v917, %v917
        %v926 = vmul.bf16 %v918, %v918
        %v927 = vmul.bf16 %v919, %v919
        %v928 = vmul.bf16 %v920, %v920
        %v929 = vmul.bf16 %v913, %v921
        %v930 = vmul.bf16 %v914, %v922
        %v931 = vmul.bf16 %v915, %v923
        %v932 = vmul.bf16 %v916, %v924
        %v933 = vmul.bf16 %v917, %v925
        %v934 = vmul.bf16 %v918, %v926
        %v935 = vmul.bf16 %v919, %v927
        %v936 = vmul.bf16 %v920, %v928
        %v937 = vmul.bf16 %v929, 1027030327
        %v938 = vmul.bf16 %v930, 1027030327
        %v939 = vmul.bf16 %v931, 1027030327
        %v940 = vmul.bf16 %v932, 1027030327
        %v941 = vmul.bf16 %v933, 1027030327
        %v942 = vmul.bf16 %v934, 1027030327
        %v943 = vmul.bf16 %v935, 1027030327
        %v944 = vmul.bf16 %v936, 1027030327
        %v945 = vadd.bf16 %v913, %v937
        %v946 = vadd.bf16 %v914, %v938
        %v947 = vadd.bf16 %v915, %v939
        %v948 = vadd.bf16 %v916, %v940
        %v949 = vadd.bf16 %v917, %v941
        %v950 = vadd.bf16 %v918, %v942
        %v951 = vadd.bf16 %v919, %v943
        %v952 = vadd.bf16 %v920, %v944
        %v953 = vmul.bf16 %v945, 1061961548
        %v954 = vmul.bf16 %v946, 1061961548
        %v955 = vmul.bf16 %v947, 1061961548
        %v956 = vmul.bf16 %v948, 1061961548
        %v957 = vmul.bf16 %v949, 1061961548
        %v958 = vmul.bf16 %v950, 1061961548
        %v959 = vmul.bf16 %v951, 1061961548
        %v960 = vmul.bf16 %v952, 1061961548
        %v961 = vtanh.bf16.pop %v953
        %v962 = vtanh.bf16.pop %v954
        %v963 = vtanh.bf16.pop %v955
        %v964 = vtanh.bf16.pop %v956
        %v965 = vtanh.bf16.pop %v957
        %v966 = vtanh.bf16.pop %v958
        %v967 = vtanh.bf16.pop %v959
        %v968 = vtanh.bf16.pop %v960
        %v969 = vadd.bf16 %v961, 1065369472
        %v970 = vadd.bf16 %v962, 1065369472
        %v971 = vadd.bf16 %v963, 1065369472
        %v972 = vadd.bf16 %v964, 1065369472
        %v973 = vadd.bf16 %v965, 1065369472
        %v974 = vadd.bf16 %v966, 1065369472
        %v975 = vadd.bf16 %v967, 1065369472
        %v976 = vadd.bf16 %v968, 1065369472
        %v977 = vmul.bf16 %v969, 1056980736
        %v978 = vmul.bf16 %v970, 1056980736
        %v979 = vmul.bf16 %v971, 1056980736
        %v980 = vmul.bf16 %v972, 1056980736
        %v981 = vmul.bf16 %v973, 1056980736
        %v982 = vmul.bf16 %v974, 1056980736
        %v983 = vmul.bf16 %v975, 1056980736
        %v984 = vmul.bf16 %v976, 1056980736
        %v985 = vmul.bf16 %v913, %v977
        %v986 = vmul.bf16 %v914, %v978
        %v987 = vmul.bf16 %v915, %v979
        %v988 = vmul.bf16 %v916, %v980
        %v989 = vmul.bf16 %v917, %v981
        %v990 = vmul.bf16 %v918, %v982
        %v991 = vmul.bf16 %v919, %v983
        %v992 = vmul.bf16 %v920, %v984
        %v993 = vld [vmem:[#allocation4] sm:$0xf]
        %v994 = vld [vmem:[#allocation4 + $0x4] sm:$0xf]
        %v995 = vld [vmem:[#allocation4 + $0x8] sm:$0xf]
        %v996 = vld [vmem:[#allocation4 + $0xc] sm:$0xf]
        %v997 = vld [vmem:[#allocation4 + $0x10] sm:$0xf]
        %v998 = vld [vmem:[#allocation4 + $0x14] sm:$0xf]
        %v999 = vld [vmem:[#allocation4 + $0x18] sm:$0xf]
        %v1000 = vld [vmem:[#allocation4 + $0x1c] sm:$0xf]
        %v1001 = vld [vmem:[#allocation4 + $0x20] sm:$0xf]
        %v1002 = vld [vmem:[#allocation4 + $0x24] sm:$0xf]
        %v1003 = vld [vmem:[#allocation4 + $0x28] sm:$0xf]
        %v1004 = vld [vmem:[#allocation4 + $0x2c] sm:$0xf]
        %v1005 = vld [vmem:[#allocation4 + $0x30] sm:$0xf]
        %v1006 = vld [vmem:[#allocation4 + $0x34] sm:$0xf]
        %v1007 = vld [vmem:[#allocation4 + $0x38] sm:$0xf]
        %v1008 = vld [vmem:[#allocation4 + $0x3c] sm:$0xf]
        %v1009 = vld [vmem:[#allocation4 + $0x40] sm:$0xf]
        %v1010 = vld [vmem:[#allocation4 + $0x44] sm:$0xf]
        %v1011 = vld [vmem:[#allocation4 + $0x48] sm:$0xf]
        %v1012 = vld [vmem:[#allocation4 + $0x4c] sm:$0xf]
        %v1013 = vld [vmem:[#allocation4 + $0x50] sm:$0xf]
        %v1014 = vld [vmem:[#allocation4 + $0x54] sm:$0xf]
        %v1015 = vld [vmem:[#allocation4 + $0x58] sm:$0xf]
        %v1016 = vld [vmem:[#allocation4 + $0x5c] sm:$0xf]
        %v1017 = vld [vmem:[#allocation4 + $0x60] sm:$0xf]
        %v1018 = vld [vmem:[#allocation4 + $0x64] sm:$0xf]
        %v1019 = vld [vmem:[#allocation4 + $0x68] sm:$0xf]
        %v1020 = vld [vmem:[#allocation4 + $0x6c] sm:$0xf]
        %v1021 = vld [vmem:[#allocation4 + $0x70] sm:$0xf]
        %v1022 = vld [vmem:[#allocation4 + $0x74] sm:$0xf]
        %v1023 = vld [vmem:[#allocation4 + $0x78] sm:$0xf]
        %v1024 = vld [vmem:[#allocation4 + $0x7c] sm:$0xf]
        %v1025 = vld [vmem:[#allocation4 + $0x80] sm:$0xf]
        %v1026 = vld [vmem:[#allocation4 + $0x84] sm:$0xf]
        %v1027 = vld [vmem:[#allocation4 + $0x88] sm:$0xf]
        %v1028 = vld [vmem:[#allocation4 + $0x8c] sm:$0xf]
        %v1029 = vld [vmem:[#allocation4 + $0x90] sm:$0xf]
        %v1030 = vld [vmem:[#allocation4 + $0x94] sm:$0xf]
        %v1031 = vld [vmem:[#allocation4 + $0x98] sm:$0xf]
        %v1032 = vld [vmem:[#allocation4 + $0x9c] sm:$0xf]
        %v1033 = vld [vmem:[#allocation4 + $0xa0] sm:$0xf]
        %v1034 = vld [vmem:[#allocation4 + $0xa4] sm:$0xf]
        %v1035 = vld [vmem:[#allocation4 + $0xa8] sm:$0xf]
        %v1036 = vld [vmem:[#allocation4 + $0xac] sm:$0xf]
        %v1037 = vld [vmem:[#allocation4 + $0xb0] sm:$0xf]
        %v1038 = vld [vmem:[#allocation4 + $0xb4] sm:$0xf]
        %v1039 = vld [vmem:[#allocation4 + $0xb8] sm:$0xf]
        %v1040 = vld [vmem:[#allocation4 + $0xbc] sm:$0xf]
        %v1041 = vld [vmem:[#allocation4 + $0xc0] sm:$0xf]
        %v1042 = vld [vmem:[#allocation4 + $0xc4] sm:$0xf]
        %v1043 = vld [vmem:[#allocation4 + $0xc8] sm:$0xf]
        %v1044 = vld [vmem:[#allocation4 + $0xcc] sm:$0xf]
        %v1045 = vld [vmem:[#allocation4 + $0xd0] sm:$0xf]
        %v1046 = vld [vmem:[#allocation4 + $0xd4] sm:$0xf]
        %v1047 = vld [vmem:[#allocation4 + $0xd8] sm:$0xf]
        %v1048 = vld [vmem:[#allocation4 + $0xdc] sm:$0xf]
        %v1049 = vld [vmem:[#allocation4 + $0xe0] sm:$0xf]
        %v1050 = vld [vmem:[#allocation4 + $0xe4] sm:$0xf]
        %v1051 = vld [vmem:[#allocation4 + $0xe8] sm:$0xf]
        %v1052 = vld [vmem:[#allocation4 + $0xec] sm:$0xf]
        %v1053 = vld [vmem:[#allocation4 + $0xf0] sm:$0xf]
        %v1054 = vld [vmem:[#allocation4 + $0xf4] sm:$0xf]
        %v1055 = vld [vmem:[#allocation4 + $0xf8] sm:$0xf]
        %v1056 = vld [vmem:[#allocation4 + $0xfc] sm:$0xf]
        %v1057 = vld [vmem:[%s6] sm:$0x1]
        %v1059 = vlaneseq
        %v1060 = vshrl.u32 %v1059, 7
        %v1061 = vsub.s32 0, %v1060
        %v1062 = vrot.slane %v1057, %v1061
        %v1128 = vunpack.c.l.b16 %v993
        %v1129 = vunpack.c.l.b16 %v994
        %v1130 = vunpack.c.l.b16 %v995
        %v1131 = vunpack.c.l.b16 %v996
        %v1132 = vunpack.c.l.b16 %v997
        %v1133 = vunpack.c.l.b16 %v998
        %v1134 = vunpack.c.l.b16 %v999
        %v1135 = vunpack.c.l.b16 %v1000
        %v1136 = vunpack.c.l.b16 %v1001
        %v1137 = vunpack.c.l.b16 %v1002
        %v1138 = vunpack.c.l.b16 %v1003
        %v1139 = vunpack.c.l.b16 %v1004
        %v1140 = vunpack.c.l.b16 %v1005
        %v1141 = vunpack.c.l.b16 %v1006
        %v1142 = vunpack.c.l.b16 %v1007
        %v1143 = vunpack.c.l.b16 %v1008
        %v1144 = vunpack.c.l.b16 %v1009
        %v1145 = vunpack.c.l.b16 %v1010
        %v1146 = vunpack.c.l.b16 %v1011
        %v1147 = vunpack.c.l.b16 %v1012
        %v1148 = vunpack.c.l.b16 %v1013
        %v1149 = vunpack.c.l.b16 %v1014
        %v1150 = vunpack.c.l.b16 %v1015
        %v1151 = vunpack.c.l.b16 %v1016
        %v1152 = vunpack.c.l.b16 %v1017
        %v1153 = vunpack.c.l.b16 %v1018
        %v1154 = vunpack.c.l.b16 %v1019
        %v1155 = vunpack.c.l.b16 %v1020
        %v1156 = vunpack.c.l.b16 %v1021
        %v1157 = vunpack.c.l.b16 %v1022
        %v1158 = vunpack.c.l.b16 %v1023
        %v1159 = vunpack.c.l.b16 %v1024
        %v1160 = vunpack.c.l.b16 %v1025
        %v1161 = vunpack.c.l.b16 %v1026
        %v1162 = vunpack.c.l.b16 %v1027
        %v1163 = vunpack.c.l.b16 %v1028
        %v1164 = vunpack.c.l.b16 %v1029
        %v1165 = vunpack.c.l.b16 %v1030
        %v1166 = vunpack.c.l.b16 %v1031
        %v1167 = vunpack.c.l.b16 %v1032
        %v1168 = vunpack.c.l.b16 %v1033
        %v1169 = vunpack.c.l.b16 %v1034
        %v1170 = vunpack.c.l.b16 %v1035
        %v1171 = vunpack.c.l.b16 %v1036
        %v1172 = vunpack.c.l.b16 %v1037
        %v1173 = vunpack.c.l.b16 %v1038
        %v1174 = vunpack.c.l.b16 %v1039
        %v1175 = vunpack.c.l.b16 %v1040
        %v1176 = vunpack.c.l.b16 %v1041
        %v1177 = vunpack.c.l.b16 %v1042
        %v1178 = vunpack.c.l.b16 %v1043
        %v1179 = vunpack.c.l.b16 %v1044
        %v1180 = vunpack.c.l.b16 %v1045
        %v1181 = vunpack.c.l.b16 %v1046
        %v1182 = vunpack.c.l.b16 %v1047
        %v1183 = vunpack.c.l.b16 %v1048
        %v1184 = vunpack.c.l.b16 %v1049
        %v1185 = vunpack.c.l.b16 %v1050
        %v1186 = vunpack.c.l.b16 %v1051
        %v1187 = vunpack.c.l.b16 %v1052
        %v1188 = vunpack.c.l.b16 %v1053
        %v1189 = vunpack.c.l.b16 %v1054
        %v1190 = vunpack.c.l.b16 %v1055
        %v1191 = vunpack.c.l.b16 %v1056
        %v1192 = vpack.c.b16 %v1129, %v1128
        %v1193 = vpack.c.b16 %v1131, %v1130
        %v1194 = vpack.c.b16 %v1133, %v1132
        %v1195 = vpack.c.b16 %v1135, %v1134
        %v1196 = vpack.c.b16 %v1137, %v1136
        %v1197 = vpack.c.b16 %v1139, %v1138
        %v1198 = vpack.c.b16 %v1141, %v1140
        %v1199 = vpack.c.b16 %v1143, %v1142
        %v1200 = vpack.c.b16 %v1145, %v1144
        %v1201 = vpack.c.b16 %v1147, %v1146
        %v1202 = vpack.c.b16 %v1149, %v1148
        %v1203 = vpack.c.b16 %v1151, %v1150
        %v1204 = vpack.c.b16 %v1153, %v1152
        %v1205 = vpack.c.b16 %v1155, %v1154
        %v1206 = vpack.c.b16 %v1157, %v1156
        %v1207 = vpack.c.b16 %v1159, %v1158
        %v1208 = vpack.c.b16 %v1161, %v1160
        %v1209 = vpack.c.b16 %v1163, %v1162
        %v1210 = vpack.c.b16 %v1165, %v1164
        %v1211 = vpack.c.b16 %v1167, %v1166
        %v1212 = vpack.c.b16 %v1169, %v1168
        %v1213 = vpack.c.b16 %v1171, %v1170
        %v1214 = vpack.c.b16 %v1173, %v1172
        %v1215 = vpack.c.b16 %v1175, %v1174
        %v1216 = vpack.c.b16 %v1177, %v1176
        %v1217 = vpack.c.b16 %v1179, %v1178
        %v1218 = vpack.c.b16 %v1181, %v1180
        %v1219 = vpack.c.b16 %v1183, %v1182
        %v1220 = vpack.c.b16 %v1185, %v1184
        %v1221 = vpack.c.b16 %v1187, %v1186
        %v1222 = vpack.c.b16 %v1189, %v1188
        %v1223 = vpack.c.b16 %v1191, %v1190
        %1256 = vmatprep.subr.bf16.mxu0 0
        %1257 = vmatpush1.bf16.msra.mxu0 %v1192
        %1258 = vmatprep.subr.bf16.mxu0 0
        %1259 = vmatpush1.bf16.msra.mxu0 %v1193
        %1260 = vmatprep.subr.bf16.mxu0 0
        %1261 = vmatpush1.bf16.msra.mxu0 %v1194
        %1262 = vmatprep.subr.bf16.mxu0 0
        %1263 = vmatpush1.bf16.msra.mxu0 %v1195
        %1264 = vmatprep.subr.bf16.mxu0 0
        %1265 = vmatpush1.bf16.msra.mxu0 %v1196
        %1266 = vmatprep.subr.bf16.mxu0 0
        %1267 = vmatpush1.bf16.msra.mxu0 %v1197
        %1268 = vmatprep.subr.bf16.mxu0 0
        %1269 = vmatpush1.bf16.msra.mxu0 %v1198
        %1270 = vmatprep.subr.bf16.mxu0 0
        %1271 = vmatpush1.bf16.msra.mxu0 %v1199
        %1272 = vmatprep.subr.bf16.mxu0 0
        %1273 = vmatpush1.bf16.msra.mxu0 %v1200
        %1274 = vmatprep.subr.bf16.mxu0 0
        %1275 = vmatpush1.bf16.msra.mxu0 %v1201
        %1276 = vmatprep.subr.bf16.mxu0 0
        %1277 = vmatpush1.bf16.msra.mxu0 %v1202
        %1278 = vmatprep.subr.bf16.mxu0 0
        %1279 = vmatpush1.bf16.msra.mxu0 %v1203
        %1280 = vmatprep.subr.bf16.mxu0 0
        %1281 = vmatpush1.bf16.msra.mxu0 %v1204
        %1282 = vmatprep.subr.bf16.mxu0 0
        %1283 = vmatpush1.bf16.msra.mxu0 %v1205
        %1284 = vmatprep.subr.bf16.mxu0 0
        %1285 = vmatpush1.bf16.msra.mxu0 %v1206
        %1286 = vmatprep.subr.bf16.mxu0 0
        %1287 = vmatpush1.bf16.msra.mxu0 %v1207
        %1288 = vmatprep.mubr.bf16.mxu0 %v986
        %1289 = vmatmul.mubr.bf16.gmra.mrb[0].mxu0 %v985
        %v1290 = vpop.f32.mrb[0].mxu0
        %v1291 = vadd.f32 %v1062, %v1290
        %v1292 = vpop.f32.mrb[0].mxu0
        %v1293 = vpop.f32.mrb[0].mxu0
        %v1294 = vadd.f32 %v1062, %v1293
        %v1295 = vpop.f32.mrb[0].mxu0
        %1296 = vmatprep.mubr.bf16.mxu0 %v990
        %1297 = vmatmul.mubr.bf16.gmra.mrb[0].mxu0 %v989
        %v1298 = vpop.f32.mrb[0].mxu0
        %v1299 = vadd.f32 %v1062, %v1298
        %v1300 = vpop.f32.mrb[0].mxu0
        %v1301 = vpop.f32.mrb[0].mxu0
        %v1302 = vadd.f32 %v1062, %v1301
        %v1303 = vpop.f32.mrb[0].mxu0
        %1304 = vdwg.mxu0
        %1305 = vmatprep.subr.bf16.mxu0 0
        %1306 = vmatpush1.bf16.msra.mxu0 %v1208
        %1307 = vmatprep.subr.bf16.mxu0 0
        %1308 = vmatpush1.bf16.msra.mxu0 %v1209
        %1309 = vmatprep.subr.bf16.mxu0 0
        %1310 = vmatpush1.bf16.msra.mxu0 %v1210
        %1311 = vmatprep.subr.bf16.mxu0 0
        %1312 = vmatpush1.bf16.msra.mxu0 %v1211
        %1313 = vmatprep.subr.bf16.mxu0 0
        %1314 = vmatpush1.bf16.msra.mxu0 %v1212
        %1315 = vmatprep.subr.bf16.mxu0 0
        %1316 = vmatpush1.bf16.msra.mxu0 %v1213
        %1317 = vmatprep.subr.bf16.mxu0 0
        %1318 = vmatpush1.bf16.msra.mxu0 %v1214
        %1319 = vmatprep.subr.bf16.mxu0 0
        %1320 = vmatpush1.bf16.msra.mxu0 %v1215
        %1321 = vmatprep.subr.bf16.mxu0 0
        %1322 = vmatpush1.bf16.msra.mxu0 %v1216
        %1323 = vmatprep.subr.bf16.mxu0 0
        %1324 = vmatpush1.bf16.msra.mxu0 %v1217
        %1325 = vmatprep.subr.bf16.mxu0 0
        %1326 = vmatpush1.bf16.msra.mxu0 %v1218
        %1327 = vmatprep.subr.bf16.mxu0 0
        %1328 = vmatpush1.bf16.msra.mxu0 %v1219
        %1329 = vmatprep.subr.bf16.mxu0 0
        %1330 = vmatpush1.bf16.msra.mxu0 %v1220
        %1331 = vmatprep.subr.bf16.mxu0 0
        %1332 = vmatpush1.bf16.msra.mxu0 %v1221
        %1333 = vmatprep.subr.bf16.mxu0 0
        %1334 = vmatpush1.bf16.msra.mxu0 %v1222
        %1335 = vmatprep.subr.bf16.mxu0 0
        %1336 = vmatpush1.bf16.msra.mxu0 %v1223
        %1337 = vmatprep.mubr.bf16.mxu0 %v988
        %1338 = vmatmul.mubr.bf16.gmra.mrb[0].mxu0 %v987
        %v1339 = vpop.f32.mrb[0].mxu0
        %v1340 = vadd.f32 %v1291, %v1339
        %v1341 = vpop.f32.mrb[0].mxu0
        %v1342 = vpop.f32.mrb[0].mxu0
        %v1343 = vadd.f32 %v1294, %v1342
        %v1344 = vpop.f32.mrb[0].mxu0
        %1345 = vmatprep.mubr.bf16.mxu0 %v992
        %1346 = vmatmul.mubr.bf16.gmra.mrb[0].mxu0 %v991
        %v1347 = vpop.f32.mrb[0].mxu0
        %v1348 = vadd.f32 %v1299, %v1347
        %v1349 = vpop.f32.mrb[0].mxu0
        %v1350 = vpop.f32.mrb[0].mxu0
        %v1351 = vadd.f32 %v1302, %v1350
        %v1352 = vpop.f32.mrb[0].mxu0
        %1353 = vdwg.mxu0
        %v1354 = vadd.f32 %v468, %v1340
        %v1355 = vadd.f32 %v469, %v1343
        %v1356 = vadd.f32 %v470, %v1348
        %v1357 = vadd.f32 %v471, %v1351
        %1358 = vst [vmem:[%s259] sm:$0xff] %v1354
        %1359 = vst [vmem:[%s259 + $0x8] sm:$0xff] %v1355
        %1360 = vst [vmem:[%s259 + $0x10] sm:$0xff] %v1356
        %1361 = vst [vmem:[%s259 + $0x18] sm:$0xff] %v1357
        %s1362 = sand.u32 %s170, 1
        %s1363 = scalar_lea.sflag [#allocation6], %s1362
        %s1364 = sand.u32 %s170, 1
        %s1365 = smul.addr %s1364, 32
        %s1366 = scalar_lea.vmem [#allocation7], %s1365
        // Predicated region
        $region131: #{tpu_custom_call.1} parent=43 // pred_check
          %p1367 = pneg %p180
        $region132: #{tpu_custom_call.1} parent=43 // pred_check_branch
          %1369 = sbr.rel (%p1367) target = $region134
        $region133: #{tpu_custom_call.1} parent=43 // pred_region
          %s1370 = smul.u32 4, %s27
          %s1371 = ssub.s32 10, %s1370
          %p1372 = scmp.lt.s32.totalorder %s1371, 4
          %s1373 = scalar_select %p1372, %s1371, 4
          %s1374 = smul.u32 128, %s1373
          %s1376 = ssub.s32 512, %s1374
          %1377 = vsyncadd %s1363, %s1376
          %p1378 = scmp.ne.s32.totalorder 0, %s1374
          %s1379 = smul.addr %s26, 10
          %s1380 = sadd.s32 %s1370, %s1379
          %s1381 = smul.addr %s1380, 128
          %s1382 = scalar_lea.hbm %s7, %s1381
          %s1383 = smul.u32 8, %s1373
          %s1384 = sshll.u32 %s1366, 4
          %s1385 = int_to_ptr.vmem [resolvable:$true] %s1384
          %s1386 = sshll.u32 %s1383, 4
          %1390 = dma.vmem_to_hbm [thread:$0]  (%p1378), %s1385, %s1386, %s1382, %s1363, 128, 128, 8
        $region134: #{tpu_custom_call.1} parent=43 // pred_fallthru
          _
      $region44: #{tpu_custom_call.1} parent=5 // pred_fallthru
        _
      %p1391 = scmp.le.s32.totalorder 2, %s17
      // Predicated region
      $region135: #{tpu_custom_call.1} parent=5 // pred_check
        %p1392 = pneg %p1391
      $region136: #{tpu_custom_call.1} parent=5 // pred_check_branch
        %1394 = sbr.rel (%p1392) target = $region138
      $region137: #{tpu_custom_call.1} parent=5 // pred_region
        %s1395 = ssub.s32 %s17, 2
        // Predicated region
        $region139: #{tpu_custom_call.1} parent=137 // pred_check
          %p1396 = pneg %p186
        $region140: #{tpu_custom_call.1} parent=137 // pred_check_branch
          %1398 = sbr.rel (%p1396) target = $region142
        $region141: #{tpu_custom_call.1} parent=137 // pred_region
          %s1399 = sand.u32 %s171, 1
          %s1400 = scalar_lea.sflag [#allocation6], %s1399
          %s1401 = sand.u32 %s171, 1
          %s1402 = smul.addr %s1401, 32
          %s1403 = scalar_lea.vmem [#allocation7], %s1402
          %1404 = dma.done %s1400, 512
        $region142: #{tpu_custom_call.1} parent=137 // pred_fallthru
          _
      $region138: #{tpu_custom_call.1} parent=5 // pred_fallthru
        _
    $region6: #{tpu_custom_call.1} parent=1 // loop_footer
      %s21 = sadd.s32 1, %s17
    $region7: #{tpu_custom_call.1} parent=1 // loop_footer_branch
      %16 = sbr.rel target = $region3
    $region8: #{tpu_custom_call.1} parent=1 // loop_exit
      _
    %1405 = vsyncpa [#allocation5], 1
    %s1406 = scalar_lea.sflag [#allocation5], 1
    %1407 = vsyncpa %s1406, 1
    %1408 = vsyncpa [#allocation6], 1
    %s1409 = scalar_lea.sflag [#allocation6], 1
    %1410 = vsyncpa %s1409, 1
  %1411 = vsyncmov [#allocation3]
  %s1412 = vpop.sfrf %1411
  %p1413 = scmp.eq.s32.totalorder %s1412, 0
  %p1414 = pneg %p1413
  %1416 = shalt.err (%p1414)
  %s1417 = scalar_lea.sflag [#allocation3], 1
  %1418 = vsyncmov %s1417
  %s1419 = vpop.sfrf %1418
  %p1420 = scmp.eq.s32.totalorder %s1419, 0
  %p1421 = pneg %p1420
  %1423 = shalt.err (%p1421)

</llo_original>
